<compile_context>
chip_gen: v6e
topology: v6e:2x2x1
jax: 0.10.0
libtpu: 0.0.40
codegen_flags: <defaults>
</compile_context>

<pallas_src>
import jax
import jax.numpy as jnp
from jax.experimental import pallas as pl
from jax.experimental.pallas import tpu as pltpu


def cppn_kernel(x_ref, w1c0_ref, w1c1_ref, b1_ref, w2_ref, b2_ref,
                we_ref, be_ref, w3_ref, b3_ref, o_ref):
    # x_ref: (2, tm) -- batch on the lane axis.
    x0 = x_ref[0:1, :]                                   # (1, tm)
    x1 = x_ref[1:2, :]                                   # (1, tm)

    # Layer 1 (in=2 -> out=64): two broadcast FMAs on the VPU.
    h = w1c0_ref[...] * x0 + w1c1_ref[...] * x1 + b1_ref[...]   # (64, tm)
    h = jnp.maximum(h, 0.0)

    # Layers 2 & 3 (64 -> 64): feature-major MXU matmuls, f32 accumulate.
    h = jnp.dot(w2_ref[...], h, preferred_element_type=jnp.float32) + b2_ref[...]
    h = jnp.maximum(h, 0.0)
    h = jnp.dot(we_ref[...], h, preferred_element_type=jnp.float32) + be_ref[...]
    h = jnp.maximum(h, 0.0)

    # Layer 4 (64 -> 3): (3, 64) @ (64, tm) -> (3, tm); output stays lane-dense.
    logits = jnp.dot(w3_ref[...], h, preferred_element_type=jnp.float32) + b3_ref[...]
    o_ref[...] = jax.nn.sigmoid(logits)                  # (3, tm)


def cppn_forward(x, params, *, tm=1024):
    """x: (N, 2) float32 -> (N, 3) float32.  Semantics of CPPN1.forward."""
    N = x.shape[0]
    w1, b1, w2, b2, we, be, w3, b3 = params              # PyTorch (out, in) weights

    # Pad the batch up to a multiple of tm (handles arbitrary N, incl. tails)
    # and go feature-major: batch on the last (lane) axis.
    n_pad = pl.cdiv(N, tm) * tm
    xt = jnp.zeros((2, n_pad), jnp.float32).at[:, :N].set(x.T)

    # Split the (64, 2) first-layer weight into its two columns in the wrapper
    # so the kernel's VPU path needs no in-kernel lane slicing; reshape biases
    # to (out, 1) so they broadcast along the lane axis inside the kernel.
    w1c0 = w1[:, 0:1]                                    # (64, 1)
    w1c1 = w1[:, 1:2]                                    # (64, 1)
    b1c = b1.reshape(64, 1)
    b2c = b2.reshape(64, 1)
    bec = be.reshape(64, 1)
    b3c = b3.reshape(3, 1)

    grid = (n_pad // tm,)
    full = lambda a: pl.BlockSpec(a.shape, lambda i: (0, 0))  # VMEM-resident

    flops = 2 * n_pad * (2 * 64 + 64 * 64 + 64 * 64 + 64 * 3)
    weight_bytes = sum(int(a.size) * 4 for a in params)

    out_t = pl.pallas_call(
        cppn_kernel,
        out_shape=jax.ShapeDtypeStruct((3, n_pad), jnp.float32),
        grid=grid,
        in_specs=[
            pl.BlockSpec((2, tm), lambda i: (0, i)),     # streamed x tile (lane-dense)
            full(w1c0), full(w1c1), full(b1c),
            full(w2), full(b2c),
            full(we), full(bec),
            full(w3), full(b3c),
        ],
        out_specs=pl.BlockSpec((3, tm), lambda i: (0, i)),  # lane-dense output
        compiler_params=pltpu.CompilerParams(
            dimension_semantics=("parallel",),
            # Working set at tm=1024 is ~1.3 MiB; default scoped VMEM is ample.
            # If tm is pushed very large (>~16k) also raise vmem_limit_bytes.
        ),
        cost_estimate=pl.CostEstimate(
            flops=flops,
            transcendentals=3 * n_pad,                   # sigmoid exp
            bytes_accessed=n_pad * (2 + 3) * 4 + weight_bytes,
        ),
    )(xt, w1c0, w1c1, b1c, w2, b2c, we, bec, w3, b3c)

    # Back to the PyTorch (N, 3) layout; drop padded columns (layout plumbing).
    return out_t[:, :N].T


def init_params(key):
    # Deterministic init mimicking nn.Linear's U(-1/sqrt(fan_in), 1/sqrt(fan_in)),
    # weights stored in PyTorch (out_features, in_features) convention.
    def linear(k, fan_in, fan_out):
        kw, kb = jax.random.split(k)
        bound = 1.0 / jnp.sqrt(jnp.float32(fan_in))
        w = jax.random.uniform(kw, (fan_out, fan_in), jnp.float32, -bound, bound)
        b = jax.random.uniform(kb, (fan_out,), jnp.float32, -bound, bound)
        return w, b

    k1, k2, k3, k4 = jax.random.split(key, 4)
    w1, b1 = linear(k1, 2, 64)    # fc1
    w2, b2 = linear(k2, 64, 64)   # fc2
    we, be = linear(k3, 64, 64)   # fce1
    w3, b3 = linear(k4, 64, 3)    # fc3
    return (w1, b1, w2, b2, we, be, w3, b3)


if __name__ == "__main__":
    key = jax.random.PRNGKey(0)
    kp, kx = jax.random.split(key)
    params = init_params(kp)

    # CPPN inputs are (x, y) coordinates: shape (N, 2).
    # N deliberately NOT a multiple of the tile to exercise the padding path,
    # and > tm so the grid has more than one step.
    N = 2500
    x = jax.random.uniform(kx, (N, 2), jnp.float32, -1.0, 1.0)

    out = jax.block_until_ready(cppn_forward(x, params, tm=1024))

    # Cross-check against a plain-JAX (row-major, PyTorch-convention) reference.
    w1, b1, w2, b2, we, be, w3, b3 = params
    h = jnp.maximum(x @ w1.T + b1, 0.0)
    h = jnp.maximum(h @ w2.T + b2, 0.0)
    h = jnp.maximum(h @ we.T + be, 0.0)
    ref = jax.nn.sigmoid(h @ w3.T + b3)

    assert out.shape == (N, 3)
    assert jnp.max(jnp.abs(out - ref)) < 2e-5

    print("KERNEL_OK")
</pallas_src>

<mosaic_0001>
module attributes {stable_mosaic.version = 11 : i64} {
  func.func @cppn_kernel(%arg0: i32, %arg1: memref<2x1024xf32, #tpu.memory_space<vmem>>, %arg2: memref<64x1xf32, #tpu.memory_space<vmem>>, %arg3: memref<64x1xf32, #tpu.memory_space<vmem>>, %arg4: memref<64x1xf32, #tpu.memory_space<vmem>>, %arg5: memref<64x64xf32, #tpu.memory_space<vmem>>, %arg6: memref<64x1xf32, #tpu.memory_space<vmem>>, %arg7: memref<64x64xf32, #tpu.memory_space<vmem>>, %arg8: memref<64x1xf32, #tpu.memory_space<vmem>>, %arg9: memref<3x64xf32, #tpu.memory_space<vmem>>, %arg10: memref<3x1xf32, #tpu.memory_space<vmem>>, %arg11: memref<3x1024xf32, #tpu.memory_space<vmem>>) attributes {dimension_semantics = [#tpu.dimension_semantics<parallel>], iteration_bounds = array<i64: 3>, scalar_prefetch = 0 : i64, scratch_operands = 0 : i64, tpu.core_type = #tpu.core_type<tc>, window_params = [{transform_indices = @transform_0, window_bounds = array<i64: 2, 1024>}, {pipeline_mode = #tpu.pipeline_mode<synchronous>, transform_indices = @transform_1, window_bounds = array<i64: 64, 1>}, {pipeline_mode = #tpu.pipeline_mode<synchronous>, transform_indices = @transform_2, window_bounds = array<i64: 64, 1>}, {pipeline_mode = #tpu.pipeline_mode<synchronous>, transform_indices = @transform_3, window_bounds = array<i64: 64, 1>}, {pipeline_mode = #tpu.pipeline_mode<synchronous>, transform_indices = @transform_4, window_bounds = array<i64: 64, 64>}, {pipeline_mode = #tpu.pipeline_mode<synchronous>, transform_indices = @transform_5, window_bounds = array<i64: 64, 1>}, {pipeline_mode = #tpu.pipeline_mode<synchronous>, transform_indices = @transform_6, window_bounds = array<i64: 64, 64>}, {pipeline_mode = #tpu.pipeline_mode<synchronous>, transform_indices = @transform_7, window_bounds = array<i64: 64, 1>}, {pipeline_mode = #tpu.pipeline_mode<synchronous>, transform_indices = @transform_8, window_bounds = array<i64: 3, 64>}, {pipeline_mode = #tpu.pipeline_mode<synchronous>, transform_indices = @transform_9, window_bounds = array<i64: 3, 1>}, {transform_indices = @transform_10, window_bounds = array<i64: 3, 1024>}]} {
    %c0 = arith.constant 0 : index
    %c0_0 = arith.constant 0 : index
    %0 = vector.load %arg1[%c0, %c0_0] : memref<2x1024xf32, #tpu.memory_space<vmem>>, vector<1x1024xf32>
    %c1 = arith.constant 1 : index
    %c0_1 = arith.constant 0 : index
    %1 = vector.load %arg1[%c1, %c0_1] : memref<2x1024xf32, #tpu.memory_space<vmem>>, vector<1x1024xf32>
    %c0_2 = arith.constant 0 : index
    %c0_3 = arith.constant 0 : index
    %2 = vector.load %arg2[%c0_2, %c0_3] : memref<64x1xf32, #tpu.memory_space<vmem>>, vector<64x1xf32>
    %3 = vector.broadcast %2 : vector<64x1xf32> to vector<64x1024xf32>
    %4 = vector.broadcast %0 : vector<1x1024xf32> to vector<64x1024xf32>
    %5 = arith.mulf %3, %4 : vector<64x1024xf32>
    %c0_4 = arith.constant 0 : index
    %c0_5 = arith.constant 0 : index
    %6 = vector.load %arg3[%c0_4, %c0_5] : memref<64x1xf32, #tpu.memory_space<vmem>>, vector<64x1xf32>
    %7 = vector.broadcast %6 : vector<64x1xf32> to vector<64x1024xf32>
    %8 = vector.broadcast %1 : vector<1x1024xf32> to vector<64x1024xf32>
    %9 = arith.mulf %7, %8 : vector<64x1024xf32>
    %10 = arith.addf %5, %9 : vector<64x1024xf32>
    %c0_6 = arith.constant 0 : index
    %c0_7 = arith.constant 0 : index
    %11 = vector.load %arg4[%c0_6, %c0_7] : memref<64x1xf32, #tpu.memory_space<vmem>>, vector<64x1xf32>
    %12 = vector.broadcast %11 : vector<64x1xf32> to vector<64x1024xf32>
    %13 = arith.addf %10, %12 : vector<64x1024xf32>
    %cst = arith.constant 0.000000e+00 : f32
    %14 = vector.broadcast %cst : f32 to vector<64x1024xf32>
    %15 = arith.maximumf %13, %14 : vector<64x1024xf32>
    %c0_8 = arith.constant 0 : index
    %c0_9 = arith.constant 0 : index
    %16 = vector.load %arg5[%c0_8, %c0_9] : memref<64x64xf32, #tpu.memory_space<vmem>>, vector<64x64xf32>
    %cst_10 = arith.constant dense<0.000000e+00> : vector<64x1024xf32>
    %17 = tpu.matmul %16, %15, %cst_10 {dimension_numbers = #tpu.dot_dimension_numbers<[1], [0], [0], [1], [0, 0, 1, 1], [], []>} : vector<64x64xf32>, vector<64x1024xf32>, vector<64x1024xf32> -> vector<64x1024xf32>
    %c0_11 = arith.constant 0 : index
    %c0_12 = arith.constant 0 : index
    %18 = vector.load %arg6[%c0_11, %c0_12] : memref<64x1xf32, #tpu.memory_space<vmem>>, vector<64x1xf32>
    %19 = vector.broadcast %18 : vector<64x1xf32> to vector<64x1024xf32>
    %20 = arith.addf %17, %19 : vector<64x1024xf32>
    %cst_13 = arith.constant 0.000000e+00 : f32
    %21 = vector.broadcast %cst_13 : f32 to vector<64x1024xf32>
    %22 = arith.maximumf %20, %21 : vector<64x1024xf32>
    %c0_14 = arith.constant 0 : index
    %c0_15 = arith.constant 0 : index
    %23 = vector.load %arg7[%c0_14, %c0_15] : memref<64x64xf32, #tpu.memory_space<vmem>>, vector<64x64xf32>
    %cst_16 = arith.constant dense<0.000000e+00> : vector<64x1024xf32>
    %24 = tpu.matmul %23, %22, %cst_16 {dimension_numbers = #tpu.dot_dimension_numbers<[1], [0], [0], [1], [0, 0, 1, 1], [], []>} : vector<64x64xf32>, vector<64x1024xf32>, vector<64x1024xf32> -> vector<64x1024xf32>
    %c0_17 = arith.constant 0 : index
    %c0_18 = arith.constant 0 : index
    %25 = vector.load %arg8[%c0_17, %c0_18] : memref<64x1xf32, #tpu.memory_space<vmem>>, vector<64x1xf32>
    %26 = vector.broadcast %25 : vector<64x1xf32> to vector<64x1024xf32>
    %27 = arith.addf %24, %26 : vector<64x1024xf32>
    %cst_19 = arith.constant 0.000000e+00 : f32
    %28 = vector.broadcast %cst_19 : f32 to vector<64x1024xf32>
    %29 = arith.maximumf %27, %28 : vector<64x1024xf32>
    %c0_20 = arith.constant 0 : index
    %c0_21 = arith.constant 0 : index
    %30 = vector.load %arg9[%c0_20, %c0_21] : memref<3x64xf32, #tpu.memory_space<vmem>>, vector<3x64xf32>
    %cst_22 = arith.constant dense<0.000000e+00> : vector<3x1024xf32>
    %31 = tpu.matmul %30, %29, %cst_22 {dimension_numbers = #tpu.dot_dimension_numbers<[1], [0], [0], [1], [0, 0, 1, 1], [], []>} : vector<3x64xf32>, vector<64x1024xf32>, vector<3x1024xf32> -> vector<3x1024xf32>
    %c0_23 = arith.constant 0 : index
    %c0_24 = arith.constant 0 : index
    %32 = vector.load %arg10[%c0_23, %c0_24] : memref<3x1xf32, #tpu.memory_space<vmem>>, vector<3x1xf32>
    %33 = vector.broadcast %32 : vector<3x1xf32> to vector<3x1024xf32>
    %34 = arith.addf %31, %33 : vector<3x1024xf32>
    %35 = arith.negf %34 : vector<3x1024xf32>
    %36 = math.exp %35 : vector<3x1024xf32>
    %cst_25 = arith.constant 1.000000e+00 : f32
    %37 = vector.broadcast %cst_25 : f32 to vector<3x1024xf32>
    %38 = arith.addf %37, %36 : vector<3x1024xf32>
    %39 = arith.divf %37, %38 : vector<3x1024xf32>
    %c0_26 = arith.constant 0 : index
    %c0_27 = arith.constant 0 : index
    %40 = vector.load %arg11[%c0_26, %c0_27] : memref<3x1024xf32, #tpu.memory_space<vmem>>, vector<3x1024xf32>
    tpu.vector_store %arg11[%c0_26, %c0_27], %39 {strides = array<i32>} : memref<3x1024xf32, #tpu.memory_space<vmem>>, vector<3x1024xf32>,
    return
  }
  func.func @transform_0(%arg0: i32) -> (i32, i32) {
    %c0_i32 = arith.constant 0 : i32
    %c0_i32_0 = arith.constant 0 : i32
    return %c0_i32, %arg0 : i32, i32
  }
  func.func @transform_1(%arg0: i32) -> (i32, i32) {
    %c0_i32 = arith.constant 0 : i32
    %c0_i32_0 = arith.constant 0 : i32
    %c0_i32_1 = arith.constant 0 : i32
    return %c0_i32, %c0_i32_0 : i32, i32
  }
  func.func @transform_2(%arg0: i32) -> (i32, i32) {
    %c0_i32 = arith.constant 0 : i32
    %c0_i32_0 = arith.constant 0 : i32
    %c0_i32_1 = arith.constant 0 : i32
    return %c0_i32, %c0_i32_0 : i32, i32
  }
  func.func @transform_3(%arg0: i32) -> (i32, i32) {
    %c0_i32 = arith.constant 0 : i32
    %c0_i32_0 = arith.constant 0 : i32
    %c0_i32_1 = arith.constant 0 : i32
    return %c0_i32, %c0_i32_0 : i32, i32
  }
  func.func @transform_4(%arg0: i32) -> (i32, i32) {
    %c0_i32 = arith.constant 0 : i32
    %c0_i32_0 = arith.constant 0 : i32
    %c0_i32_1 = arith.constant 0 : i32
    return %c0_i32, %c0_i32_0 : i32, i32
  }
  func.func @transform_5(%arg0: i32) -> (i32, i32) {
    %c0_i32 = arith.constant 0 : i32
    %c0_i32_0 = arith.constant 0 : i32
    %c0_i32_1 = arith.constant 0 : i32
    return %c0_i32, %c0_i32_0 : i32, i32
  }
  func.func @transform_6(%arg0: i32) -> (i32, i32) {
    %c0_i32 = arith.constant 0 : i32
    %c0_i32_0 = arith.constant 0 : i32
    %c0_i32_1 = arith.constant 0 : i32
    return %c0_i32, %c0_i32_0 : i32, i32
  }
  func.func @transform_7(%arg0: i32) -> (i32, i32) {
    %c0_i32 = arith.constant 0 : i32
    %c0_i32_0 = arith.constant 0 : i32
    %c0_i32_1 = arith.constant 0 : i32
    return %c0_i32, %c0_i32_0 : i32, i32
  }
  func.func @transform_8(%arg0: i32) -> (i32, i32) {
    %c0_i32 = arith.constant 0 : i32
    %c0_i32_0 = arith.constant 0 : i32
    %c0_i32_1 = arith.constant 0 : i32
    return %c0_i32, %c0_i32_0 : i32, i32
  }
  func.func @transform_9(%arg0: i32) -> (i32, i32) {
    %c0_i32 = arith.constant 0 : i32
    %c0_i32_0 = arith.constant 0 : i32
    %c0_i32_1 = arith.constant 0 : i32
    return %c0_i32, %c0_i32_0 : i32, i32
  }
  func.func @transform_10(%arg0: i32) -> (i32, i32) {
    %c0_i32 = arith.constant 0 : i32
    %c0_i32_0 = arith.constant 0 : i32
    return %c0_i32, %arg0 : i32, i32
  }
}

</mosaic_0001>

<llo_original>
// kernel: tpu_custom_call.1
$region0: #{tpu_custom_call.1}
  #allocation0 [shape = 'u32[]', space=smem, size = 0x4, offset = 0x4, fixed_abs, tag = 'smem constant byte address 0x4 - core index']
  #allocation1 [shape = 'u32[144,128]{1,0:T(1,128)}', space=vmem, size = 0x12000, scoped, tag = 'internal scratch']
  %s0 = inlined_call_operand.vmem [shape: f32[2,3072], index: 0, kind: input, shape index: {}]
  %s1 = inlined_call_operand.vmem [shape: f32[64,1], index: 1, kind: input, shape index: {}]
  %s2 = inlined_call_operand.vmem [shape: f32[64,1], index: 2, kind: input, shape index: {}]
  %s3 = inlined_call_operand.vmem [shape: f32[64,1], index: 3, kind: input, shape index: {}]
  %s4 = inlined_call_operand.vmem [shape: f32[64,64], index: 4, kind: input, shape index: {}]
  %s5 = inlined_call_operand.vmem [shape: f32[64,1], index: 5, kind: input, shape index: {}]
  %s6 = inlined_call_operand.vmem [shape: f32[64,64], index: 6, kind: input, shape index: {}]
  %s7 = inlined_call_operand.vmem [shape: f32[64,1], index: 7, kind: input, shape index: {}]
  %s8 = inlined_call_operand.vmem [shape: f32[3,64], index: 8, kind: input, shape index: {}]
  %s9 = inlined_call_operand.vmem [shape: f32[3,1], index: 9, kind: input, shape index: {}]
  %s10 = inlined_call_operand.hbm [shape: f32[3,3072], index: 10, kind: output, shape index: {}]
  %s11 = sld [smem:[#allocation0]]
  $region73: #{tpu_custom_call.1} parent=0
    _
  %s13 = ssub.s32 1, %s11
  %s14 = scalar_select 0, %s13, %s11
  $region1: #{tpu_custom_call.1} parent=0
    #allocation2 [shape = 'u8[32768]{0}', space=vmem, size = 0x8000, scoped, tag = 'output window, operand 0']
    #allocation3 [shape = 's32[2]{0}', space=sflag, size = 0x8, scoped, tag = 'scoped memory for tpu_custom_call.1']
    %15 = vsyncpa [#allocation3], 0
    %s16 = scalar_lea.sflag [#allocation3], 1
    %17 = vsyncpa %s16, 0
    loop: start=0, step=1, limit=5
    $region2: #{tpu_custom_call.1} parent=1 // loop_pre_header
      _
    $region3: #{tpu_custom_call.1} parent=1 // loop_header
      %s19 = sphi 0, %s23
      %p20 = scmp.ge.s32.totalorder %s19, 5
      %s29 = sphi 0, %s31
      %s32 = sphi 0, %s29
      %s33 = sphi 0, %s32
      %s49 = sphi 0, %s33
      %s53 = sphi 0, %s53
      %s55 = sphi 0, %s53
      %s56 = sphi 0, %s55
      %s70 = sphi 0, %s56
      %s74 = sphi 0, %s74
      %s76 = sphi 0, %s74
      %s77 = sphi 0, %s76
      %s91 = sphi 0, %s77
      %s95 = sphi 0, %s95
      %s97 = sphi 0, %s95
      %s98 = sphi 0, %s97
      %s112 = sphi 0, %s98
      %s116 = sphi 0, %s116
      %s118 = sphi 0, %s116
      %s119 = sphi 0, %s118
      %s133 = sphi 0, %s119
      %s137 = sphi 0, %s137
      %s139 = sphi 0, %s137
      %s140 = sphi 0, %s139
      %s154 = sphi 0, %s140
      %s158 = sphi 0, %s158
      %s160 = sphi 0, %s158
      %s161 = sphi 0, %s160
      %s175 = sphi 0, %s161
      %s179 = sphi 0, %s179
      %s181 = sphi 0, %s179
      %s182 = sphi 0, %s181
      %s196 = sphi 0, %s182
      %s200 = sphi 0, %s200
      %s202 = sphi 0, %s200
      %s203 = sphi 0, %s202
      %s217 = sphi 0, %s203
      %s221 = sphi 0, %s221
      %s223 = sphi 0, %s221
      %s224 = sphi 0, %s223
      %s238 = sphi 0, %s224
      %s244 = sphi 0, %s246
      %s247 = sphi 0, %s244
      %s248 = sphi 0, %s247
      %s264 = sphi 0, %s248
    $region4: #{tpu_custom_call.1} parent=1 // loop_header_branch
      %22 = sbr.rel (%p20) target = $region8
    $region5: #{tpu_custom_call.1} parent=1 // loop_body
      %s24 = ssub.s32 %s19, 1
      %s25 = ssub.s32 %s19, 2
      %s26 = sadd.s32 %s19, 1
      %s27 = ssub.s32 %s19, %s26
      %p28 = scmp.eq.s32.totalorder %s27, 0
      %s30 = sadd.s32 %s29, 1
      %s31 = scalar_select %p28, %s29, %s30
      %p34 = pneg %p28
      %p35 = scmp.eq.s32.totalorder %s19, 2
      %p36 = por %p34, %p35
      %p37 = scmp.ne.s32.totalorder %s29, %s32
      %p38 = scmp.eq.s32.totalorder %s19, 0
      %p39 = por %p37, %p38
      %p40 = scmp.ne.s32.totalorder %s29, %s32
      %p41 = scmp.eq.s32.totalorder %s24, 2
      %p42 = por %p40, %p41
      %p43 = scmp.ne.s32.totalorder %s32, %s33
      %p44 = scmp.eq.s32.totalorder %s24, 0
      %p45 = por %p43, %p44
      %p46 = scmp.ne.s32.totalorder %s32, %s33
      %p47 = scmp.eq.s32.totalorder %s25, 2
      %p48 = por %p46, %p47
      %p50 = scmp.ne.s32.totalorder %s33, %s49
      %p51 = scmp.eq.s32.totalorder %s25, 0
      %p52 = por %p50, %p51
      %s54 = sadd.s32 %s53, 1
      %p57 = scmp.eq.s32.totalorder %s19, 2
      %p58 = scmp.ne.s32.totalorder %s53, %s55
      %p59 = scmp.eq.s32.totalorder %s19, 0
      %p60 = por %p58, %p59
      %p61 = scmp.ne.s32.totalorder %s53, %s55
      %p62 = scmp.eq.s32.totalorder %s24, 2
      %p63 = por %p61, %p62
      %p64 = scmp.ne.s32.totalorder %s55, %s56
      %p65 = scmp.eq.s32.totalorder %s24, 0
      %p66 = por %p64, %p65
      %p67 = scmp.ne.s32.totalorder %s55, %s56
      %p68 = scmp.eq.s32.totalorder %s25, 2
      %p69 = por %p67, %p68
      %p71 = scmp.ne.s32.totalorder %s56, %s70
      %p72 = scmp.eq.s32.totalorder %s25, 0
      %p73 = por %p71, %p72
      %s75 = sadd.s32 %s74, 1
      %p78 = scmp.eq.s32.totalorder %s19, 2
      %p79 = scmp.ne.s32.totalorder %s74, %s76
      %p80 = scmp.eq.s32.totalorder %s19, 0
      %p81 = por %p79, %p80
      %p82 = scmp.ne.s32.totalorder %s74, %s76
      %p83 = scmp.eq.s32.totalorder %s24, 2
      %p84 = por %p82, %p83
      %p85 = scmp.ne.s32.totalorder %s76, %s77
      %p86 = scmp.eq.s32.totalorder %s24, 0
      %p87 = por %p85, %p86
      %p88 = scmp.ne.s32.totalorder %s76, %s77
      %p89 = scmp.eq.s32.totalorder %s25, 2
      %p90 = por %p88, %p89
      %p92 = scmp.ne.s32.totalorder %s77, %s91
      %p93 = scmp.eq.s32.totalorder %s25, 0
      %p94 = por %p92, %p93
      %s96 = sadd.s32 %s95, 1
      %p99 = scmp.eq.s32.totalorder %s19, 2
      %p100 = scmp.ne.s32.totalorder %s95, %s97
      %p101 = scmp.eq.s32.totalorder %s19, 0
      %p102 = por %p100, %p101
      %p103 = scmp.ne.s32.totalorder %s95, %s97
      %p104 = scmp.eq.s32.totalorder %s24, 2
      %p105 = por %p103, %p104
      %p106 = scmp.ne.s32.totalorder %s97, %s98
      %p107 = scmp.eq.s32.totalorder %s24, 0
      %p108 = por %p106, %p107
      %p109 = scmp.ne.s32.totalorder %s97, %s98
      %p110 = scmp.eq.s32.totalorder %s25, 2
      %p111 = por %p109, %p110
      %p113 = scmp.ne.s32.totalorder %s98, %s112
      %p114 = scmp.eq.s32.totalorder %s25, 0
      %p115 = por %p113, %p114
      %s117 = sadd.s32 %s116, 1
      %p120 = scmp.eq.s32.totalorder %s19, 2
      %p121 = scmp.ne.s32.totalorder %s116, %s118
      %p122 = scmp.eq.s32.totalorder %s19, 0
      %p123 = por %p121, %p122
      %p124 = scmp.ne.s32.totalorder %s116, %s118
      %p125 = scmp.eq.s32.totalorder %s24, 2
      %p126 = por %p124, %p125
      %p127 = scmp.ne.s32.totalorder %s118, %s119
      %p128 = scmp.eq.s32.totalorder %s24, 0
      %p129 = por %p127, %p128
      %p130 = scmp.ne.s32.totalorder %s118, %s119
      %p131 = scmp.eq.s32.totalorder %s25, 2
      %p132 = por %p130, %p131
      %p134 = scmp.ne.s32.totalorder %s119, %s133
      %p135 = scmp.eq.s32.totalorder %s25, 0
      %p136 = por %p134, %p135
      %s138 = sadd.s32 %s137, 1
      %p141 = scmp.eq.s32.totalorder %s19, 2
      %p142 = scmp.ne.s32.totalorder %s137, %s139
      %p143 = scmp.eq.s32.totalorder %s19, 0
      %p144 = por %p142, %p143
      %p145 = scmp.ne.s32.totalorder %s137, %s139
      %p146 = scmp.eq.s32.totalorder %s24, 2
      %p147 = por %p145, %p146
      %p148 = scmp.ne.s32.totalorder %s139, %s140
      %p149 = scmp.eq.s32.totalorder %s24, 0
      %p150 = por %p148, %p149
      %p151 = scmp.ne.s32.totalorder %s139, %s140
      %p152 = scmp.eq.s32.totalorder %s25, 2
      %p153 = por %p151, %p152
      %p155 = scmp.ne.s32.totalorder %s140, %s154
      %p156 = scmp.eq.s32.totalorder %s25, 0
      %p157 = por %p155, %p156
      %s159 = sadd.s32 %s158, 1
      %p162 = scmp.eq.s32.totalorder %s19, 2
      %p163 = scmp.ne.s32.totalorder %s158, %s160
      %p164 = scmp.eq.s32.totalorder %s19, 0
      %p165 = por %p163, %p164
      %p166 = scmp.ne.s32.totalorder %s158, %s160
      %p167 = scmp.eq.s32.totalorder %s24, 2
      %p168 = por %p166, %p167
      %p169 = scmp.ne.s32.totalorder %s160, %s161
      %p170 = scmp.eq.s32.totalorder %s24, 0
      %p171 = por %p169, %p170
      %p172 = scmp.ne.s32.totalorder %s160, %s161
      %p173 = scmp.eq.s32.totalorder %s25, 2
      %p174 = por %p172, %p173
      %p176 = scmp.ne.s32.totalorder %s161, %s175
      %p177 = scmp.eq.s32.totalorder %s25, 0
      %p178 = por %p176, %p177
      %s180 = sadd.s32 %s179, 1
      %p183 = scmp.eq.s32.totalorder %s19, 2
      %p184 = scmp.ne.s32.totalorder %s179, %s181
      %p185 = scmp.eq.s32.totalorder %s19, 0
      %p186 = por %p184, %p185
      %p187 = scmp.ne.s32.totalorder %s179, %s181
      %p188 = scmp.eq.s32.totalorder %s24, 2
      %p189 = por %p187, %p188
      %p190 = scmp.ne.s32.totalorder %s181, %s182
      %p191 = scmp.eq.s32.totalorder %s24, 0
      %p192 = por %p190, %p191
      %p193 = scmp.ne.s32.totalorder %s181, %s182
      %p194 = scmp.eq.s32.totalorder %s25, 2
      %p195 = por %p193, %p194
      %p197 = scmp.ne.s32.totalorder %s182, %s196
      %p198 = scmp.eq.s32.totalorder %s25, 0
      %p199 = por %p197, %p198
      %s201 = sadd.s32 %s200, 1
      %p204 = scmp.eq.s32.totalorder %s19, 2
      %p205 = scmp.ne.s32.totalorder %s200, %s202
      %p206 = scmp.eq.s32.totalorder %s19, 0
      %p207 = por %p205, %p206
      %p208 = scmp.ne.s32.totalorder %s200, %s202
      %p209 = scmp.eq.s32.totalorder %s24, 2
      %p210 = por %p208, %p209
      %p211 = scmp.ne.s32.totalorder %s202, %s203
      %p212 = scmp.eq.s32.totalorder %s24, 0
      %p213 = por %p211, %p212
      %p214 = scmp.ne.s32.totalorder %s202, %s203
      %p215 = scmp.eq.s32.totalorder %s25, 2
      %p216 = por %p214, %p215
      %p218 = scmp.ne.s32.totalorder %s203, %s217
      %p219 = scmp.eq.s32.totalorder %s25, 0
      %p220 = por %p218, %p219
      %s222 = sadd.s32 %s221, 1
      %p225 = scmp.eq.s32.totalorder %s19, 2
      %p226 = scmp.ne.s32.totalorder %s221, %s223
      %p227 = scmp.eq.s32.totalorder %s19, 0
      %p228 = por %p226, %p227
      %p229 = scmp.ne.s32.totalorder %s221, %s223
      %p230 = scmp.eq.s32.totalorder %s24, 2
      %p231 = por %p229, %p230
      %p232 = scmp.ne.s32.totalorder %s223, %s224
      %p233 = scmp.eq.s32.totalorder %s24, 0
      %p234 = por %p232, %p233
      %p235 = scmp.ne.s32.totalorder %s223, %s224
      %p236 = scmp.eq.s32.totalorder %s25, 2
      %p237 = por %p235, %p236
      %p239 = scmp.ne.s32.totalorder %s224, %s238
      %p240 = scmp.eq.s32.totalorder %s25, 0
      %p241 = por %p239, %p240
      %s242 = ssub.s32 %s19, %s26
      %p243 = scmp.eq.s32.totalorder %s242, 0
      %s245 = sadd.s32 %s244, 1
      %s246 = scalar_select %p243, %s244, %s245
      %p249 = pneg %p243
      %p250 = scmp.eq.s32.totalorder %s19, 2
      %p251 = por %p249, %p250
      %p252 = scmp.ne.s32.totalorder %s244, %s247
      %p253 = scmp.eq.s32.totalorder %s19, 0
      %p254 = por %p252, %p253
      %p255 = scmp.ne.s32.totalorder %s244, %s247
      %p256 = scmp.eq.s32.totalorder %s24, 2
      %p257 = por %p255, %p256
      %p258 = scmp.ne.s32.totalorder %s247, %s248
      %p259 = scmp.eq.s32.totalorder %s24, 0
      %p260 = por %p258, %p259
      %p261 = scmp.ne.s32.totalorder %s247, %s248
      %p262 = scmp.eq.s32.totalorder %s25, 2
      %p263 = por %p261, %p262
      %p265 = scmp.ne.s32.totalorder %s248, %s264
      %p266 = scmp.eq.s32.totalorder %s25, 0
      %p267 = por %p265, %p266
      %p268 = scmp.le.s32.totalorder 1, %s19
      %p269 = scmp.lt.s32.totalorder %s19, 4
      %p270 = pnand %p268, %p269
      %p271 = pneg %p270
      // Predicated region
      $region9: #{tpu_custom_call.1} parent=5 // pred_check
        _
      $region10: #{tpu_custom_call.1} parent=5 // pred_check_branch
        %273 = sbr.rel (%p270) target = $region12
      $region11: #{tpu_custom_call.1} parent=5 // pred_region
        %s274 = ssub.s32 %s19, 1
        // Predicated region
        $region13: #{tpu_custom_call.1} parent=11 // pred_check
          %p275 = pneg %p66
        $region14: #{tpu_custom_call.1} parent=11 // pred_check_branch
          %277 = sbr.rel (%p275) target = $region16
        $region15: #{tpu_custom_call.1} parent=11 // pred_region
          _
        $region16: #{tpu_custom_call.1} parent=11 // pred_fallthru
          _
        // Predicated region
        $region17: #{tpu_custom_call.1} parent=11 // pred_check
          %p278 = pneg %p87
        $region18: #{tpu_custom_call.1} parent=11 // pred_check_branch
          %280 = sbr.rel (%p278) target = $region20
        $region19: #{tpu_custom_call.1} parent=11 // pred_region
          _
        $region20: #{tpu_custom_call.1} parent=11 // pred_fallthru
          _
        // Predicated region
        $region21: #{tpu_custom_call.1} parent=11 // pred_check
          %p281 = pneg %p108
        $region22: #{tpu_custom_call.1} parent=11 // pred_check_branch
          %283 = sbr.rel (%p281) target = $region24
        $region23: #{tpu_custom_call.1} parent=11 // pred_region
          _
        $region24: #{tpu_custom_call.1} parent=11 // pred_fallthru
          _
        // Predicated region
        $region25: #{tpu_custom_call.1} parent=11 // pred_check
          %p284 = pneg %p129
        $region26: #{tpu_custom_call.1} parent=11 // pred_check_branch
          %286 = sbr.rel (%p284) target = $region28
        $region27: #{tpu_custom_call.1} parent=11 // pred_region
          _
        $region28: #{tpu_custom_call.1} parent=11 // pred_fallthru
          _
        // Predicated region
        $region29: #{tpu_custom_call.1} parent=11 // pred_check
          %p287 = pneg %p150
        $region30: #{tpu_custom_call.1} parent=11 // pred_check_branch
          %289 = sbr.rel (%p287) target = $region32
        $region31: #{tpu_custom_call.1} parent=11 // pred_region
          _
        $region32: #{tpu_custom_call.1} parent=11 // pred_fallthru
          _
        // Predicated region
        $region33: #{tpu_custom_call.1} parent=11 // pred_check
          %p290 = pneg %p171
        $region34: #{tpu_custom_call.1} parent=11 // pred_check_branch
          %292 = sbr.rel (%p290) target = $region36
        $region35: #{tpu_custom_call.1} parent=11 // pred_region
          _
        $region36: #{tpu_custom_call.1} parent=11 // pred_fallthru
          _
        // Predicated region
        $region37: #{tpu_custom_call.1} parent=11 // pred_check
          %p293 = pneg %p192
        $region38: #{tpu_custom_call.1} parent=11 // pred_check_branch
          %295 = sbr.rel (%p293) target = $region40
        $region39: #{tpu_custom_call.1} parent=11 // pred_region
          _
        $region40: #{tpu_custom_call.1} parent=11 // pred_fallthru
          _
        // Predicated region
        $region41: #{tpu_custom_call.1} parent=11 // pred_check
          %p296 = pneg %p213
        $region42: #{tpu_custom_call.1} parent=11 // pred_check_branch
          %298 = sbr.rel (%p296) target = $region44
        $region43: #{tpu_custom_call.1} parent=11 // pred_region
          _
        $region44: #{tpu_custom_call.1} parent=11 // pred_fallthru
          _
        // Predicated region
        $region45: #{tpu_custom_call.1} parent=11 // pred_check
          %p299 = pneg %p234
        $region46: #{tpu_custom_call.1} parent=11 // pred_check_branch
          %301 = sbr.rel (%p299) target = $region48
        $region47: #{tpu_custom_call.1} parent=11 // pred_region
          _
        $region48: #{tpu_custom_call.1} parent=11 // pred_fallthru
          _
      $region12: #{tpu_custom_call.1} parent=5 // pred_fallthru
        _
      %p302 = scmp.lt.s32.totalorder %s19, 3
      // Predicated region
      $region49: #{tpu_custom_call.1} parent=5 // pred_check
        %p303 = pneg %p302
      $region50: #{tpu_custom_call.1} parent=5 // pred_check_branch
        %305 = sbr.rel (%p303) target = $region52
      $region51: #{tpu_custom_call.1} parent=5 // pred_region
        // Predicated region
        $region53: #{tpu_custom_call.1} parent=51 // pred_check
          %p306 = pneg %p39
        $region54: #{tpu_custom_call.1} parent=51 // pred_check_branch
          %308 = sbr.rel (%p306) target = $region56
        $region55: #{tpu_custom_call.1} parent=51 // pred_region
          %s309 = smul.u32 8, %s19
          %p310 = scmp.lt.s32.totalorder %s309, 23
          %s311 = scalar_select %p310, %s309, 23
          %s312 = smul.addr %s311, 2
          %s313 = scalar_lea.vmem %s0, %s312
          %s314 = smul.u32 8, %s19
        $region56: #{tpu_custom_call.1} parent=51 // pred_fallthru
          _
      $region52: #{tpu_custom_call.1} parent=5 // pred_fallthru
        _
      %p315 = scmp.le.s32.totalorder 1, %s19
      %p316 = scmp.lt.s32.totalorder %s19, 4
      %p317 = pnand %p315, %p316
      %p318 = pneg %p317
      // Predicated region
      $region57: #{tpu_custom_call.1} parent=5 // pred_check
        _
      $region58: #{tpu_custom_call.1} parent=5 // pred_check_branch
        %320 = sbr.rel (%p317) target = $region60
      $region59: #{tpu_custom_call.1} parent=5 // pred_region
        %s321 = ssub.s32 %s19, 1
        %s322 = smul.u32 8, %s24
        %p323 = scmp.lt.s32.totalorder %s322, 23
        %s324 = scalar_select %p323, %s322, 23
        %s325 = smul.addr %s324, 2
        %s326 = scalar_lea.vmem %s0, %s325
        %p327 = pneg %p45
        %p328 = pneg %p42
        %p329 = pneg %p66
        %p330 = pneg %p63
        %p331 = pneg %p87
        %p332 = pneg %p84
        %p333 = pneg %p108
        %p334 = pneg %p105
        %p335 = pneg %p129
        %p336 = pneg %p126
        %p337 = pneg %p150
        %p338 = pneg %p147
        %p339 = pneg %p171
        %p340 = pneg %p168
        %p341 = pneg %p192
        %p342 = pneg %p189
        %p343 = pneg %p213
        %p344 = pneg %p210
        %p345 = pneg %p234
        %p346 = pneg %p231
        %p347 = pneg %p260
        %p348 = pneg %p257
        %s349 = sand.u32 %s247, 1
        %s350 = scalar_lea.sflag [#allocation3], %s349
        %s351 = sand.u32 %s247, 1
        %s352 = smul.addr %s351, 32
        %s353 = scalar_lea.vmem [#allocation2], %s352
        %s354 = smul.u32 8, %s24
        %p355 = scmp.lt.s32.totalorder %s354, 23
        %s356 = scalar_select %p355, %s354, 23
        %s357 = smul.addr %s356, 2
        %s358 = scalar_lea.vmem %s0, %s357
        %s359 = smul.u32 8, %s24
        %s360 = smul.u32 8, %s24
        %v361 = vld [vmem:[%s358] ss:$2 sm:$0xff]
        %s362 = scalar_lea.vmem %s358, 1
        %v363 = vld [vmem:[%s362] ss:$2 sm:$0xff]
        %v364 = vld [vmem:[%s1] sm:$0xff]
        %v365 = vld [vmem:[%s1 + $0x8] sm:$0xff]
        %v366 = vld [vmem:[%s1 + $0x10] sm:$0xff]
        %v367 = vld [vmem:[%s1 + $0x18] sm:$0xff]
        %v368 = vld [vmem:[%s1 + $0x20] sm:$0xff]
        %v369 = vld [vmem:[%s1 + $0x28] sm:$0xff]
        %v370 = vld [vmem:[%s1 + $0x30] sm:$0xff]
        %v371 = vld [vmem:[%s1 + $0x38] sm:$0xff]
        %373 = vset.pattern.permute.xlu0 0
        %374 = vperm.xlu0 %373, %v364
        %v375 = vpop.permute.xlu0 %374
        %378 = vset.pattern.permute.xlu0 0
        %379 = vperm.xlu0 %378, %v365
        %v380 = vpop.permute.xlu0 %379
        %383 = vset.pattern.permute.xlu0 0
        %384 = vperm.xlu0 %383, %v366
        %v385 = vpop.permute.xlu0 %384
        %388 = vset.pattern.permute.xlu0 0
        %389 = vperm.xlu0 %388, %v367
        %v390 = vpop.permute.xlu0 %389
        %393 = vset.pattern.permute.xlu0 0
        %394 = vperm.xlu0 %393, %v368
        %v395 = vpop.permute.xlu0 %394
        %398 = vset.pattern.permute.xlu0 0
        %399 = vperm.xlu0 %398, %v369
        %v400 = vpop.permute.xlu0 %399
        %403 = vset.pattern.permute.xlu0 0
        %404 = vperm.xlu0 %403, %v370
        %v405 = vpop.permute.xlu0 %404
        %408 = vset.pattern.permute.xlu0 0
        %409 = vperm.xlu0 %408, %v371
        %v410 = vpop.permute.xlu0 %409
        %v413 = vlaneseq
        %v414 = vshrl.u32 %v413, 7
        %v415 = vsub.s32 0, %v414
        %v416 = vrot.slane %v361, %v415
        %v417 = vlaneseq
        %v418 = vshrl.u32 %v417, 7
        %v419 = vsub.s32 1, %v418
        %v420 = vrot.slane %v361, %v419
        %v421 = vlaneseq
        %v422 = vshrl.u32 %v421, 7
        %v423 = vsub.s32 2, %v422
        %v424 = vrot.slane %v361, %v423
        %v425 = vlaneseq
        %v426 = vshrl.u32 %v425, 7
        %v427 = vsub.s32 3, %v426
        %v428 = vrot.slane %v361, %v427
        %v429 = vlaneseq
        %v430 = vshrl.u32 %v429, 7
        %v431 = vsub.s32 4, %v430
        %v432 = vrot.slane %v361, %v431
        %v433 = vlaneseq
        %v434 = vshrl.u32 %v433, 7
        %v435 = vsub.s32 5, %v434
        %v436 = vrot.slane %v361, %v435
        %v437 = vlaneseq
        %v438 = vshrl.u32 %v437, 7
        %v439 = vsub.s32 6, %v438
        %v440 = vrot.slane %v361, %v439
        %v441 = vlaneseq
        %v442 = vshrl.u32 %v441, 7
        %v443 = vsub.s32 7, %v442
        %v444 = vrot.slane %v361, %v443
        %v453 = vmul.f32 %v375, %v416
        %v454 = vmul.f32 %v375, %v420
        %v455 = vmul.f32 %v375, %v424
        %v456 = vmul.f32 %v375, %v428
        %v457 = vmul.f32 %v375, %v432
        %v458 = vmul.f32 %v375, %v436
        %v459 = vmul.f32 %v375, %v440
        %v460 = vmul.f32 %v375, %v444
        %v461 = vmul.f32 %v380, %v416
        %v462 = vmul.f32 %v380, %v420
        %v463 = vmul.f32 %v380, %v424
        %v464 = vmul.f32 %v380, %v428
        %v465 = vmul.f32 %v380, %v432
        %v466 = vmul.f32 %v380, %v436
        %v467 = vmul.f32 %v380, %v440
        %v468 = vmul.f32 %v380, %v444
        %v469 = vmul.f32 %v385, %v416
        %v470 = vmul.f32 %v385, %v420
        %v471 = vmul.f32 %v385, %v424
        %v472 = vmul.f32 %v385, %v428
        %v473 = vmul.f32 %v385, %v432
        %v474 = vmul.f32 %v385, %v436
        %v475 = vmul.f32 %v385, %v440
        %v476 = vmul.f32 %v385, %v444
        %v477 = vmul.f32 %v390, %v416
        %v478 = vmul.f32 %v390, %v420
        %v479 = vmul.f32 %v390, %v424
        %v480 = vmul.f32 %v390, %v428
        %v481 = vmul.f32 %v390, %v432
        %v482 = vmul.f32 %v390, %v436
        %v483 = vmul.f32 %v390, %v440
        %v484 = vmul.f32 %v390, %v444
        %v485 = vmul.f32 %v395, %v416
        %v486 = vmul.f32 %v395, %v420
        %v487 = vmul.f32 %v395, %v424
        %v488 = vmul.f32 %v395, %v428
        %v489 = vmul.f32 %v395, %v432
        %v490 = vmul.f32 %v395, %v436
        %v491 = vmul.f32 %v395, %v440
        %v492 = vmul.f32 %v395, %v444
        %v493 = vmul.f32 %v400, %v416
        %v494 = vmul.f32 %v400, %v420
        %v495 = vmul.f32 %v400, %v424
        %v496 = vmul.f32 %v400, %v428
        %v497 = vmul.f32 %v400, %v432
        %v498 = vmul.f32 %v400, %v436
        %v499 = vmul.f32 %v400, %v440
        %v500 = vmul.f32 %v400, %v444
        %v501 = vmul.f32 %v405, %v416
        %v502 = vmul.f32 %v405, %v420
        %v503 = vmul.f32 %v405, %v424
        %v504 = vmul.f32 %v405, %v428
        %v505 = vmul.f32 %v405, %v432
        %v506 = vmul.f32 %v405, %v436
        %v507 = vmul.f32 %v405, %v440
        %v508 = vmul.f32 %v405, %v444
        %v509 = vmul.f32 %v410, %v416
        %v510 = vmul.f32 %v410, %v420
        %v511 = vmul.f32 %v410, %v424
        %v512 = vmul.f32 %v410, %v428
        %v513 = vmul.f32 %v410, %v432
        %v514 = vmul.f32 %v410, %v436
        %v515 = vmul.f32 %v410, %v440
        %v516 = vmul.f32 %v410, %v444
        %v517 = vld [vmem:[%s2] sm:$0xff]
        %v518 = vld [vmem:[%s2 + $0x8] sm:$0xff]
        %v519 = vld [vmem:[%s2 + $0x10] sm:$0xff]
        %v520 = vld [vmem:[%s2 + $0x18] sm:$0xff]
        %v521 = vld [vmem:[%s2 + $0x20] sm:$0xff]
        %v522 = vld [vmem:[%s2 + $0x28] sm:$0xff]
        %v523 = vld [vmem:[%s2 + $0x30] sm:$0xff]
        %v524 = vld [vmem:[%s2 + $0x38] sm:$0xff]
        %526 = vset.pattern.permute.xlu0 0
        %527 = vperm.xlu0 %526, %v517
        %v528 = vpop.permute.xlu0 %527
        %531 = vset.pattern.permute.xlu0 0
        %532 = vperm.xlu0 %531, %v518
        %v533 = vpop.permute.xlu0 %532
        %536 = vset.pattern.permute.xlu0 0
        %537 = vperm.xlu0 %536, %v519
        %v538 = vpop.permute.xlu0 %537
        %541 = vset.pattern.permute.xlu0 0
        %542 = vperm.xlu0 %541, %v520
        %v543 = vpop.permute.xlu0 %542
        %546 = vset.pattern.permute.xlu0 0
        %547 = vperm.xlu0 %546, %v521
        %v548 = vpop.permute.xlu0 %547
        %551 = vset.pattern.permute.xlu0 0
        %552 = vperm.xlu0 %551, %v522
        %v553 = vpop.permute.xlu0 %552
        %556 = vset.pattern.permute.xlu0 0
        %557 = vperm.xlu0 %556, %v523
        %v558 = vpop.permute.xlu0 %557
        %561 = vset.pattern.permute.xlu0 0
        %562 = vperm.xlu0 %561, %v524
        %v563 = vpop.permute.xlu0 %562
        %v566 = vlaneseq
        %v567 = vshrl.u32 %v566, 7
        %v568 = vsub.s32 0, %v567
        %v569 = vrot.slane %v363, %v568
        %v570 = vlaneseq
        %v571 = vshrl.u32 %v570, 7
        %v572 = vsub.s32 1, %v571
        %v573 = vrot.slane %v363, %v572
        %v574 = vlaneseq
        %v575 = vshrl.u32 %v574, 7
        %v576 = vsub.s32 2, %v575
        %v577 = vrot.slane %v363, %v576
        %v578 = vlaneseq
        %v579 = vshrl.u32 %v578, 7
        %v580 = vsub.s32 3, %v579
        %v581 = vrot.slane %v363, %v580
        %v582 = vlaneseq
        %v583 = vshrl.u32 %v582, 7
        %v584 = vsub.s32 4, %v583
        %v585 = vrot.slane %v363, %v584
        %v586 = vlaneseq
        %v587 = vshrl.u32 %v586, 7
        %v588 = vsub.s32 5, %v587
        %v589 = vrot.slane %v363, %v588
        %v590 = vlaneseq
        %v591 = vshrl.u32 %v590, 7
        %v592 = vsub.s32 6, %v591
        %v593 = vrot.slane %v363, %v592
        %v594 = vlaneseq
        %v595 = vshrl.u32 %v594, 7
        %v596 = vsub.s32 7, %v595
        %v597 = vrot.slane %v363, %v596
        %v606 = vmul.f32 %v528, %v569
        %v607 = vmul.f32 %v528, %v573
        %v608 = vmul.f32 %v528, %v577
        %v609 = vmul.f32 %v528, %v581
        %v610 = vmul.f32 %v528, %v585
        %v611 = vmul.f32 %v528, %v589
        %v612 = vmul.f32 %v528, %v593
        %v613 = vmul.f32 %v528, %v597
        %v614 = vmul.f32 %v533, %v569
        %v615 = vmul.f32 %v533, %v573
        %v616 = vmul.f32 %v533, %v577
        %v617 = vmul.f32 %v533, %v581
        %v618 = vmul.f32 %v533, %v585
        %v619 = vmul.f32 %v533, %v589
        %v620 = vmul.f32 %v533, %v593
        %v621 = vmul.f32 %v533, %v597
        %v622 = vmul.f32 %v538, %v569
        %v623 = vmul.f32 %v538, %v573
        %v624 = vmul.f32 %v538, %v577
        %v625 = vmul.f32 %v538, %v581
        %v626 = vmul.f32 %v538, %v585
        %v627 = vmul.f32 %v538, %v589
        %v628 = vmul.f32 %v538, %v593
        %v629 = vmul.f32 %v538, %v597
        %v630 = vmul.f32 %v543, %v569
        %v631 = vmul.f32 %v543, %v573
        %v632 = vmul.f32 %v543, %v577
        %v633 = vmul.f32 %v543, %v581
        %v634 = vmul.f32 %v543, %v585
        %v635 = vmul.f32 %v543, %v589
        %v636 = vmul.f32 %v543, %v593
        %v637 = vmul.f32 %v543, %v597
        %v638 = vmul.f32 %v548, %v569
        %v639 = vmul.f32 %v548, %v573
        %v640 = vmul.f32 %v548, %v577
        %v641 = vmul.f32 %v548, %v581
        %v642 = vmul.f32 %v548, %v585
        %v643 = vmul.f32 %v548, %v589
        %v644 = vmul.f32 %v548, %v593
        %v645 = vmul.f32 %v548, %v597
        %v646 = vmul.f32 %v553, %v569
        %v647 = vmul.f32 %v553, %v573
        %v648 = vmul.f32 %v553, %v577
        %v649 = vmul.f32 %v553, %v581
        %v650 = vmul.f32 %v553, %v585
        %v651 = vmul.f32 %v553, %v589
        %v652 = vmul.f32 %v553, %v593
        %v653 = vmul.f32 %v553, %v597
        %v654 = vmul.f32 %v558, %v569
        %v655 = vmul.f32 %v558, %v573
        %v656 = vmul.f32 %v558, %v577
        %v657 = vmul.f32 %v558, %v581
        %v658 = vmul.f32 %v558, %v585
        %v659 = vmul.f32 %v558, %v589
        %v660 = vmul.f32 %v558, %v593
        %v661 = vmul.f32 %v558, %v597
        %v662 = vmul.f32 %v563, %v569
        %v663 = vmul.f32 %v563, %v573
        %v664 = vmul.f32 %v563, %v577
        %v665 = vmul.f32 %v563, %v581
        %v666 = vmul.f32 %v563, %v585
        %v667 = vmul.f32 %v563, %v589
        %v668 = vmul.f32 %v563, %v593
        %v669 = vmul.f32 %v563, %v597
        %v670 = vadd.f32 %v453, %v606
        %v671 = vadd.f32 %v454, %v607
        %v672 = vadd.f32 %v455, %v608
        %v673 = vadd.f32 %v456, %v609
        %v674 = vadd.f32 %v457, %v610
        %v675 = vadd.f32 %v458, %v611
        %v676 = vadd.f32 %v459, %v612
        %v677 = vadd.f32 %v460, %v613
        %v678 = vadd.f32 %v461, %v614
        %v679 = vadd.f32 %v462, %v615
        %v680 = vadd.f32 %v463, %v616
        %v681 = vadd.f32 %v464, %v617
        %v682 = vadd.f32 %v465, %v618
        %v683 = vadd.f32 %v466, %v619
        %v684 = vadd.f32 %v467, %v620
        %v685 = vadd.f32 %v468, %v621
        %v686 = vadd.f32 %v469, %v622
        %v687 = vadd.f32 %v470, %v623
        %v688 = vadd.f32 %v471, %v624
        %v689 = vadd.f32 %v472, %v625
        %v690 = vadd.f32 %v473, %v626
        %v691 = vadd.f32 %v474, %v627
        %v692 = vadd.f32 %v475, %v628
        %v693 = vadd.f32 %v476, %v629
        %v694 = vadd.f32 %v477, %v630
        %v695 = vadd.f32 %v478, %v631
        %v696 = vadd.f32 %v479, %v632
        %v697 = vadd.f32 %v480, %v633
        %v698 = vadd.f32 %v481, %v634
        %v699 = vadd.f32 %v482, %v635
        %v700 = vadd.f32 %v483, %v636
        %v701 = vadd.f32 %v484, %v637
        %v702 = vadd.f32 %v485, %v638
        %v703 = vadd.f32 %v486, %v639
        %v704 = vadd.f32 %v487, %v640
        %v705 = vadd.f32 %v488, %v641
        %v706 = vadd.f32 %v489, %v642
        %v707 = vadd.f32 %v490, %v643
        %v708 = vadd.f32 %v491, %v644
        %v709 = vadd.f32 %v492, %v645
        %v710 = vadd.f32 %v493, %v646
        %v711 = vadd.f32 %v494, %v647
        %v712 = vadd.f32 %v495, %v648
        %v713 = vadd.f32 %v496, %v649
        %v714 = vadd.f32 %v497, %v650
        %v715 = vadd.f32 %v498, %v651
        %v716 = vadd.f32 %v499, %v652
        %v717 = vadd.f32 %v500, %v653
        %v718 = vadd.f32 %v501, %v654
        %v719 = vadd.f32 %v502, %v655
        %v720 = vadd.f32 %v503, %v656
        %v721 = vadd.f32 %v504, %v657
        %v722 = vadd.f32 %v505, %v658
        %v723 = vadd.f32 %v506, %v659
        %v724 = vadd.f32 %v507, %v660
        %v725 = vadd.f32 %v508, %v661
        %v726 = vadd.f32 %v509, %v662
        %v727 = vadd.f32 %v510, %v663
        %v728 = vadd.f32 %v511, %v664
        %v729 = vadd.f32 %v512, %v665
        %v730 = vadd.f32 %v513, %v666
        %v731 = vadd.f32 %v514, %v667
        %v732 = vadd.f32 %v515, %v668
        %v733 = vadd.f32 %v516, %v669
        %v734 = vld [vmem:[%s3] sm:$0xff]
        %v735 = vld [vmem:[%s3 + $0x8] sm:$0xff]
        %v736 = vld [vmem:[%s3 + $0x10] sm:$0xff]
        %v737 = vld [vmem:[%s3 + $0x18] sm:$0xff]
        %v738 = vld [vmem:[%s3 + $0x20] sm:$0xff]
        %v739 = vld [vmem:[%s3 + $0x28] sm:$0xff]
        %v740 = vld [vmem:[%s3 + $0x30] sm:$0xff]
        %v741 = vld [vmem:[%s3 + $0x38] sm:$0xff]
        %743 = vset.pattern.permute.xlu0 0
        %744 = vperm.xlu0 %743, %v734
        %v745 = vpop.permute.xlu0 %744
        %748 = vset.pattern.permute.xlu0 0
        %749 = vperm.xlu0 %748, %v735
        %v750 = vpop.permute.xlu0 %749
        %753 = vset.pattern.permute.xlu0 0
        %754 = vperm.xlu0 %753, %v736
        %v755 = vpop.permute.xlu0 %754
        %758 = vset.pattern.permute.xlu0 0
        %759 = vperm.xlu0 %758, %v737
        %v760 = vpop.permute.xlu0 %759
        %763 = vset.pattern.permute.xlu0 0
        %764 = vperm.xlu0 %763, %v738
        %v765 = vpop.permute.xlu0 %764
        %768 = vset.pattern.permute.xlu0 0
        %769 = vperm.xlu0 %768, %v739
        %v770 = vpop.permute.xlu0 %769
        %773 = vset.pattern.permute.xlu0 0
        %774 = vperm.xlu0 %773, %v740
        %v775 = vpop.permute.xlu0 %774
        %778 = vset.pattern.permute.xlu0 0
        %779 = vperm.xlu0 %778, %v741
        %v780 = vpop.permute.xlu0 %779
        %v782 = vadd.f32 %v670, %v745
        %v783 = vadd.f32 %v671, %v745
        %v784 = vadd.f32 %v672, %v745
        %v785 = vadd.f32 %v673, %v745
        %v786 = vadd.f32 %v674, %v745
        %v787 = vadd.f32 %v675, %v745
        %v788 = vadd.f32 %v676, %v745
        %v789 = vadd.f32 %v677, %v745
        %v790 = vadd.f32 %v678, %v750
        %v791 = vadd.f32 %v679, %v750
        %v792 = vadd.f32 %v680, %v750
        %v793 = vadd.f32 %v681, %v750
        %v794 = vadd.f32 %v682, %v750
        %v795 = vadd.f32 %v683, %v750
        %v796 = vadd.f32 %v684, %v750
        %v797 = vadd.f32 %v685, %v750
        %v798 = vadd.f32 %v686, %v755
        %v799 = vadd.f32 %v687, %v755
        %v800 = vadd.f32 %v688, %v755
        %v801 = vadd.f32 %v689, %v755
        %v802 = vadd.f32 %v690, %v755
        %v803 = vadd.f32 %v691, %v755
        %v804 = vadd.f32 %v692, %v755
        %v805 = vadd.f32 %v693, %v755
        %v806 = vadd.f32 %v694, %v760
        %v807 = vadd.f32 %v695, %v760
        %v808 = vadd.f32 %v696, %v760
        %v809 = vadd.f32 %v697, %v760
        %v810 = vadd.f32 %v698, %v760
        %v811 = vadd.f32 %v699, %v760
        %v812 = vadd.f32 %v700, %v760
        %v813 = vadd.f32 %v701, %v760
        %v814 = vadd.f32 %v702, %v765
        %v815 = vadd.f32 %v703, %v765
        %v816 = vadd.f32 %v704, %v765
        %v817 = vadd.f32 %v705, %v765
        %v818 = vadd.f32 %v706, %v765
        %v819 = vadd.f32 %v707, %v765
        %v820 = vadd.f32 %v708, %v765
        %v821 = vadd.f32 %v709, %v765
        %v822 = vadd.f32 %v710, %v770
        %v823 = vadd.f32 %v711, %v770
        %v824 = vadd.f32 %v712, %v770
        %v825 = vadd.f32 %v713, %v770
        %v826 = vadd.f32 %v714, %v770
        %v827 = vadd.f32 %v715, %v770
        %v828 = vadd.f32 %v716, %v770
        %v829 = vadd.f32 %v717, %v770
        %v830 = vadd.f32 %v718, %v775
        %v831 = vadd.f32 %v719, %v775
        %v832 = vadd.f32 %v720, %v775
        %v833 = vadd.f32 %v721, %v775
        %v834 = vadd.f32 %v722, %v775
        %v835 = vadd.f32 %v723, %v775
        %v836 = vadd.f32 %v724, %v775
        %v837 = vadd.f32 %v725, %v775
        %v838 = vadd.f32 %v726, %v780
        %v839 = vadd.f32 %v727, %v780
        %v840 = vadd.f32 %v728, %v780
        %v841 = vadd.f32 %v729, %v780
        %v842 = vadd.f32 %v730, %v780
        %v843 = vadd.f32 %v731, %v780
        %v844 = vadd.f32 %v732, %v780
        %v845 = vadd.f32 %v733, %v780
        %v846 = vmax.f32 %v782, 0.0
        %v847 = vmax.f32 %v783, 0.0
        %v848 = vmax.f32 %v784, 0.0
        %v849 = vmax.f32 %v785, 0.0
        %v850 = vmax.f32 %v786, 0.0
        %v851 = vmax.f32 %v787, 0.0
        %v852 = vmax.f32 %v788, 0.0
        %v853 = vmax.f32 %v789, 0.0
        %v854 = vmax.f32 %v790, 0.0
        %v855 = vmax.f32 %v791, 0.0
        %v856 = vmax.f32 %v792, 0.0
        %v857 = vmax.f32 %v793, 0.0
        %v858 = vmax.f32 %v794, 0.0
        %v859 = vmax.f32 %v795, 0.0
        %v860 = vmax.f32 %v796, 0.0
        %v861 = vmax.f32 %v797, 0.0
        %v862 = vmax.f32 %v798, 0.0
        %v863 = vmax.f32 %v799, 0.0
        %v864 = vmax.f32 %v800, 0.0
        %v865 = vmax.f32 %v801, 0.0
        %v866 = vmax.f32 %v802, 0.0
        %v867 = vmax.f32 %v803, 0.0
        %v868 = vmax.f32 %v804, 0.0
        %v869 = vmax.f32 %v805, 0.0
        %v870 = vmax.f32 %v806, 0.0
        %v871 = vmax.f32 %v807, 0.0
        %v872 = vmax.f32 %v808, 0.0
        %v873 = vmax.f32 %v809, 0.0
        %v874 = vmax.f32 %v810, 0.0
        %v875 = vmax.f32 %v811, 0.0
        %v876 = vmax.f32 %v812, 0.0
        %v877 = vmax.f32 %v813, 0.0
        %v878 = vmax.f32 %v814, 0.0
        %v879 = vmax.f32 %v815, 0.0
        %v880 = vmax.f32 %v816, 0.0
        %v881 = vmax.f32 %v817, 0.0
        %v882 = vmax.f32 %v818, 0.0
        %v883 = vmax.f32 %v819, 0.0
        %v884 = vmax.f32 %v820, 0.0
        %v885 = vmax.f32 %v821, 0.0
        %v886 = vmax.f32 %v822, 0.0
        %v887 = vmax.f32 %v823, 0.0
        %v888 = vmax.f32 %v824, 0.0
        %v889 = vmax.f32 %v825, 0.0
        %v890 = vmax.f32 %v826, 0.0
        %v891 = vmax.f32 %v827, 0.0
        %v892 = vmax.f32 %v828, 0.0
        %v893 = vmax.f32 %v829, 0.0
        %v894 = vmax.f32 %v830, 0.0
        %v895 = vmax.f32 %v831, 0.0
        %v896 = vmax.f32 %v832, 0.0
        %v897 = vmax.f32 %v833, 0.0
        %v898 = vmax.f32 %v834, 0.0
        %v899 = vmax.f32 %v835, 0.0
        %v900 = vmax.f32 %v836, 0.0
        %v901 = vmax.f32 %v837, 0.0
        %v902 = vmax.f32 %v838, 0.0
        %v903 = vmax.f32 %v839, 0.0
        %v904 = vmax.f32 %v840, 0.0
        %v905 = vmax.f32 %v841, 0.0
        %v906 = vmax.f32 %v842, 0.0
        %v907 = vmax.f32 %v843, 0.0
        %v908 = vmax.f32 %v844, 0.0
        %v909 = vmax.f32 %v845, 0.0
        %v910 = vld [vmem:[%s4] sm:$0xff]
        %v911 = vld [vmem:[%s4 + $0x8] sm:$0xff]
        %v912 = vld [vmem:[%s4 + $0x10] sm:$0xff]
        %v913 = vld [vmem:[%s4 + $0x18] sm:$0xff]
        %v914 = vld [vmem:[%s4 + $0x20] sm:$0xff]
        %v915 = vld [vmem:[%s4 + $0x28] sm:$0xff]
        %v916 = vld [vmem:[%s4 + $0x30] sm:$0xff]
        %v917 = vld [vmem:[%s4 + $0x38] sm:$0xff]
        %v918 = vld [vmem:[%s5] sm:$0xff]
        %v919 = vld [vmem:[%s5 + $0x8] sm:$0xff]
        %v920 = vld [vmem:[%s5 + $0x10] sm:$0xff]
        %v921 = vld [vmem:[%s5 + $0x18] sm:$0xff]
        %v922 = vld [vmem:[%s5 + $0x20] sm:$0xff]
        %v923 = vld [vmem:[%s5 + $0x28] sm:$0xff]
        %v924 = vld [vmem:[%s5 + $0x30] sm:$0xff]
        %v925 = vld [vmem:[%s5 + $0x38] sm:$0xff]
        %927 = vset.pattern.permute.xlu0 0
        %928 = vperm.xlu0 %927, %v918
        %v929 = vpop.permute.xlu0 %928
        %932 = vset.pattern.permute.xlu0 0
        %933 = vperm.xlu0 %932, %v919
        %v934 = vpop.permute.xlu0 %933
        %937 = vset.pattern.permute.xlu0 0
        %938 = vperm.xlu0 %937, %v920
        %v939 = vpop.permute.xlu0 %938
        %942 = vset.pattern.permute.xlu0 0
        %943 = vperm.xlu0 %942, %v921
        %v944 = vpop.permute.xlu0 %943
        %947 = vset.pattern.permute.xlu0 0
        %948 = vperm.xlu0 %947, %v922
        %v949 = vpop.permute.xlu0 %948
        %952 = vset.pattern.permute.xlu0 0
        %953 = vperm.xlu0 %952, %v923
        %v954 = vpop.permute.xlu0 %953
        %957 = vset.pattern.permute.xlu0 0
        %958 = vperm.xlu0 %957, %v924
        %v959 = vpop.permute.xlu0 %958
        %962 = vset.pattern.permute.xlu0 0
        %963 = vperm.xlu0 %962, %v925
        %v964 = vpop.permute.xlu0 %963
        %vm966 = vcmask 523264
        %v968 = vsel %vm966, %v910, 0
        %v971 = vsel %vm966, %v911, 0
        %v974 = vsel %vm966, %v912, 0
        %v977 = vsel %vm966, %v913, 0
        %v980 = vsel %vm966, %v914, 0
        %v983 = vsel %vm966, %v915, 0
        %v986 = vsel %vm966, %v916, 0
        %v989 = vsel %vm966, %v917, 0
        %991 = vmatprep.subr.mxu0 0.0
        %992 = vmatpush1.msra.mxu0 0.0
        %993 = vmatprep.subr.mxu0 0.0
        %994 = vmatpush1.msra.mxu0 0.0
        %995 = vmatprep.subr.mxu0 0.0
        %996 = vmatpush1.msra.mxu0 0.0
        %997 = vmatprep.subr.mxu0 0.0
        %998 = vmatpush1.msra.mxu0 0.0
        %999 = vmatprep.subr.mxu0 0.0
        %1000 = vmatpush1.msra.mxu0 0.0
        %1001 = vmatprep.subr.mxu0 0.0
        %1002 = vmatpush1.msra.mxu0 0.0
        %1003 = vmatprep.subr.mxu0 0.0
        %1004 = vmatpush1.msra.mxu0 0.0
        %1005 = vmatprep.subr.mxu0 0.0
        %1006 = vmatpush1.msra.mxu0 0.0
        %1007 = vmatprep.subr.mxu0 %v903
        %1008 = vmatpush1.msra.mxu0 %v902
        %1009 = vmatprep.subr.mxu0 %v895
        %1010 = vmatpush1.msra.mxu0 %v894
        %1011 = vmatprep.subr.mxu0 %v887
        %1012 = vmatpush1.msra.mxu0 %v886
        %1013 = vmatprep.subr.mxu0 %v879
        %1014 = vmatpush1.msra.mxu0 %v878
        %1015 = vmatprep.subr.mxu0 %v871
        %1016 = vmatpush1.msra.mxu0 %v870
        %1017 = vmatprep.subr.mxu0 %v863
        %1018 = vmatpush1.msra.mxu0 %v862
        %1019 = vmatprep.subr.mxu0 %v855
        %1020 = vmatpush1.msra.mxu0 %v854
        %1021 = vmatprep.subr.mxu0 %v847
        %1022 = vmatpush1.msra.mxu0 %v846
        %1023 = vmatprep.subr.mxu0 0.0
        %1024 = vmatpush2.msra.mxu0 0.0
        %1025 = vmatprep.subr.mxu0 0.0
        %1026 = vmatpush2.msra.mxu0 0.0
        %1027 = vmatprep.subr.mxu0 0.0
        %1028 = vmatpush2.msra.mxu0 0.0
        %1029 = vmatprep.subr.mxu0 0.0
        %1030 = vmatpush2.msra.mxu0 0.0
        %1031 = vmatprep.subr.mxu0 0.0
        %1032 = vmatpush2.msra.mxu0 0.0
        %1033 = vmatprep.subr.mxu0 0.0
        %1034 = vmatpush2.msra.mxu0 0.0
        %1035 = vmatprep.subr.mxu0 0.0
        %1036 = vmatpush2.msra.mxu0 0.0
        %1037 = vmatprep.subr.mxu0 0.0
        %1038 = vmatpush2.msra.mxu0 0.0
        %1039 = vmatprep.subr.mxu0 0.0
        %1040 = vmatpush2.msra.mxu0 0.0
        %1041 = vmatprep.subr.mxu0 0.0
        %1042 = vmatpush2.msra.mxu0 0.0
        %1043 = vmatprep.subr.mxu0 0.0
        %1044 = vmatpush2.msra.mxu0 0.0
        %1045 = vmatprep.subr.mxu0 0.0
        %1046 = vmatpush2.msra.mxu0 0.0
        %1047 = vmatprep.subr.mxu0 0.0
        %1048 = vmatpush2.msra.mxu0 0.0
        %1049 = vmatprep.subr.mxu0 0.0
        %1050 = vmatpush2.msra.mxu0 0.0
        %1051 = vmatprep.subr.mxu0 0.0
        %1052 = vmatpush2.msra.mxu0 0.0
        %1053 = vmatprep.subr.mxu0 0.0
        %1054 = vmatpush2.msra.mxu0 0.0
        %1055 = vmatprep.mubr.f32.mxu0 0.0
        %1056 = vmatmul.mubr.f32.gmra.mxu0 %v968
        %v1057 = vpop.f32.mrf.mxu0
        %v1058 = vadd.f32 %v929, %v1057
        %v1059 = vpop.f32.mrf.mxu0
        %v1060 = vadd.f32 %v929, %v1059
        %1061 = vmatprep.mubr.f32.mxu0 0.0
        %1062 = vmatmul.mubr.f32.gmra.mxu0 %v971
        %v1063 = vpop.f32.mrf.mxu0
        %v1064 = vadd.f32 %v934, %v1063
        %v1065 = vpop.f32.mrf.mxu0
        %v1066 = vadd.f32 %v934, %v1065
        %1067 = vmatprep.mubr.f32.mxu0 0.0
        %1068 = vmatmul.mubr.f32.gmra.mxu0 %v974
        %v1069 = vpop.f32.mrf.mxu0
        %v1070 = vadd.f32 %v939, %v1069
        %v1071 = vpop.f32.mrf.mxu0
        %v1072 = vadd.f32 %v939, %v1071
        %1073 = vmatprep.mubr.f32.mxu0 0.0
        %1074 = vmatmul.mubr.f32.gmra.mxu0 %v977
        %v1075 = vpop.f32.mrf.mxu0
        %v1076 = vadd.f32 %v944, %v1075
        %v1077 = vpop.f32.mrf.mxu0
        %v1078 = vadd.f32 %v944, %v1077
        %1079 = vmatprep.mubr.f32.mxu0 0.0
        %1080 = vmatmul.mubr.f32.gmra.mxu0 %v980
        %v1081 = vpop.f32.mrf.mxu0
        %v1082 = vadd.f32 %v949, %v1081
        %v1083 = vpop.f32.mrf.mxu0
        %v1084 = vadd.f32 %v949, %v1083
        %1085 = vmatprep.mubr.f32.mxu0 0.0
        %1086 = vmatmul.mubr.f32.gmra.mxu0 %v983
        %v1087 = vpop.f32.mrf.mxu0
        %v1088 = vadd.f32 %v954, %v1087
        %v1089 = vpop.f32.mrf.mxu0
        %v1090 = vadd.f32 %v954, %v1089
        %1091 = vmatprep.mubr.f32.mxu0 0.0
        %1092 = vmatmul.mubr.f32.gmra.mxu0 %v986
        %v1093 = vpop.f32.mrf.mxu0
        %v1094 = vadd.f32 %v959, %v1093
        %v1095 = vpop.f32.mrf.mxu0
        %v1096 = vadd.f32 %v959, %v1095
        %1097 = vmatprep.mubr.f32.mxu0 0.0
        %1098 = vmatmul.mubr.f32.gmra.mxu0 %v989
        %v1099 = vpop.f32.mrf.mxu0
        %v1100 = vadd.f32 %v964, %v1099
        %v1101 = vpop.f32.mrf.mxu0
        %v1102 = vadd.f32 %v964, %v1101
        %1103 = vdwg.mxu0
        %1104 = vmatprep.subr.mxu0 0.0
        %1105 = vmatpush1.msra.mxu0 0.0
        %1106 = vmatprep.subr.mxu0 0.0
        %1107 = vmatpush1.msra.mxu0 0.0
        %1108 = vmatprep.subr.mxu0 0.0
        %1109 = vmatpush1.msra.mxu0 0.0
        %1110 = vmatprep.subr.mxu0 0.0
        %1111 = vmatpush1.msra.mxu0 0.0
        %1112 = vmatprep.subr.mxu0 0.0
        %1113 = vmatpush1.msra.mxu0 0.0
        %1114 = vmatprep.subr.mxu0 0.0
        %1115 = vmatpush1.msra.mxu0 0.0
        %1116 = vmatprep.subr.mxu0 0.0
        %1117 = vmatpush1.msra.mxu0 0.0
        %1118 = vmatprep.subr.mxu0 0.0
        %1119 = vmatpush1.msra.mxu0 0.0
        %1120 = vmatprep.subr.mxu0 %v905
        %1121 = vmatpush1.msra.mxu0 %v904
        %1122 = vmatprep.subr.mxu0 %v897
        %1123 = vmatpush1.msra.mxu0 %v896
        %1124 = vmatprep.subr.mxu0 %v889
        %1125 = vmatpush1.msra.mxu0 %v888
        %1126 = vmatprep.subr.mxu0 %v881
        %1127 = vmatpush1.msra.mxu0 %v880
        %1128 = vmatprep.subr.mxu0 %v873
        %1129 = vmatpush1.msra.mxu0 %v872
        %1130 = vmatprep.subr.mxu0 %v865
        %1131 = vmatpush1.msra.mxu0 %v864
        %1132 = vmatprep.subr.mxu0 %v857
        %1133 = vmatpush1.msra.mxu0 %v856
        %1134 = vmatprep.subr.mxu0 %v849
        %1135 = vmatpush1.msra.mxu0 %v848
        %1136 = vmatprep.subr.mxu0 0.0
        %1137 = vmatpush2.msra.mxu0 0.0
        %1138 = vmatprep.subr.mxu0 0.0
        %1139 = vmatpush2.msra.mxu0 0.0
        %1140 = vmatprep.subr.mxu0 0.0
        %1141 = vmatpush2.msra.mxu0 0.0
        %1142 = vmatprep.subr.mxu0 0.0
        %1143 = vmatpush2.msra.mxu0 0.0
        %1144 = vmatprep.subr.mxu0 0.0
        %1145 = vmatpush2.msra.mxu0 0.0
        %1146 = vmatprep.subr.mxu0 0.0
        %1147 = vmatpush2.msra.mxu0 0.0
        %1148 = vmatprep.subr.mxu0 0.0
        %1149 = vmatpush2.msra.mxu0 0.0
        %1150 = vmatprep.subr.mxu0 0.0
        %1151 = vmatpush2.msra.mxu0 0.0
        %1152 = vmatprep.subr.mxu0 0.0
        %1153 = vmatpush2.msra.mxu0 0.0
        %1154 = vmatprep.subr.mxu0 0.0
        %1155 = vmatpush2.msra.mxu0 0.0
        %1156 = vmatprep.subr.mxu0 0.0
        %1157 = vmatpush2.msra.mxu0 0.0
        %1158 = vmatprep.subr.mxu0 0.0
        %1159 = vmatpush2.msra.mxu0 0.0
        %1160 = vmatprep.subr.mxu0 0.0
        %1161 = vmatpush2.msra.mxu0 0.0
        %1162 = vmatprep.subr.mxu0 0.0
        %1163 = vmatpush2.msra.mxu0 0.0
        %1164 = vmatprep.subr.mxu0 0.0
        %1165 = vmatpush2.msra.mxu0 0.0
        %1166 = vmatprep.subr.mxu0 0.0
        %1167 = vmatpush2.msra.mxu0 0.0
        %1168 = vmatprep.mubr.f32.mxu0 0.0
        %1169 = vmatmul.mubr.f32.gmra.mxu0 %v968
        %v1170 = vpop.f32.mrf.mxu0
        %v1171 = vadd.f32 %v929, %v1170
        %v1172 = vpop.f32.mrf.mxu0
        %v1173 = vadd.f32 %v929, %v1172
        %1174 = vmatprep.mubr.f32.mxu0 0.0
        %1175 = vmatmul.mubr.f32.gmra.mxu0 %v971
        %v1176 = vpop.f32.mrf.mxu0
        %v1177 = vadd.f32 %v934, %v1176
        %v1178 = vpop.f32.mrf.mxu0
        %v1179 = vadd.f32 %v934, %v1178
        %1180 = vmatprep.mubr.f32.mxu0 0.0
        %1181 = vmatmul.mubr.f32.gmra.mxu0 %v974
        %v1182 = vpop.f32.mrf.mxu0
        %v1183 = vadd.f32 %v939, %v1182
        %v1184 = vpop.f32.mrf.mxu0
        %v1185 = vadd.f32 %v939, %v1184
        %1186 = vmatprep.mubr.f32.mxu0 0.0
        %1187 = vmatmul.mubr.f32.gmra.mxu0 %v977
        %v1188 = vpop.f32.mrf.mxu0
        %v1189 = vadd.f32 %v944, %v1188
        %v1190 = vpop.f32.mrf.mxu0
        %v1191 = vadd.f32 %v944, %v1190
        %1192 = vmatprep.mubr.f32.mxu0 0.0
        %1193 = vmatmul.mubr.f32.gmra.mxu0 %v980
        %v1194 = vpop.f32.mrf.mxu0
        %v1195 = vadd.f32 %v949, %v1194
        %v1196 = vpop.f32.mrf.mxu0
        %v1197 = vadd.f32 %v949, %v1196
        %1198 = vmatprep.mubr.f32.mxu0 0.0
        %1199 = vmatmul.mubr.f32.gmra.mxu0 %v983
        %v1200 = vpop.f32.mrf.mxu0
        %v1201 = vadd.f32 %v954, %v1200
        %v1202 = vpop.f32.mrf.mxu0
        %v1203 = vadd.f32 %v954, %v1202
        %1204 = vmatprep.mubr.f32.mxu0 0.0
        %1205 = vmatmul.mubr.f32.gmra.mxu0 %v986
        %v1206 = vpop.f32.mrf.mxu0
        %v1207 = vadd.f32 %v959, %v1206
        %v1208 = vpop.f32.mrf.mxu0
        %v1209 = vadd.f32 %v959, %v1208
        %1210 = vmatprep.mubr.f32.mxu0 0.0
        %1211 = vmatmul.mubr.f32.gmra.mxu0 %v989
        %v1212 = vpop.f32.mrf.mxu0
        %v1213 = vadd.f32 %v964, %v1212
        %v1214 = vpop.f32.mrf.mxu0
        %v1215 = vadd.f32 %v964, %v1214
        %1216 = vdwg.mxu0
        %1217 = vmatprep.subr.mxu0 0.0
        %1218 = vmatpush1.msra.mxu0 0.0
        %1219 = vmatprep.subr.mxu0 0.0
        %1220 = vmatpush1.msra.mxu0 0.0
        %1221 = vmatprep.subr.mxu0 0.0
        %1222 = vmatpush1.msra.mxu0 0.0
        %1223 = vmatprep.subr.mxu0 0.0
        %1224 = vmatpush1.msra.mxu0 0.0
        %1225 = vmatprep.subr.mxu0 0.0
        %1226 = vmatpush1.msra.mxu0 0.0
        %1227 = vmatprep.subr.mxu0 0.0
        %1228 = vmatpush1.msra.mxu0 0.0
        %1229 = vmatprep.subr.mxu0 0.0
        %1230 = vmatpush1.msra.mxu0 0.0
        %1231 = vmatprep.subr.mxu0 0.0
        %1232 = vmatpush1.msra.mxu0 0.0
        %1233 = vmatprep.subr.mxu0 %v907
        %1234 = vmatpush1.msra.mxu0 %v906
        %1235 = vmatprep.subr.mxu0 %v899
        %1236 = vmatpush1.msra.mxu0 %v898
        %1237 = vmatprep.subr.mxu0 %v891
        %1238 = vmatpush1.msra.mxu0 %v890
        %1239 = vmatprep.subr.mxu0 %v883
        %1240 = vmatpush1.msra.mxu0 %v882
        %1241 = vmatprep.subr.mxu0 %v875
        %1242 = vmatpush1.msra.mxu0 %v874
        %1243 = vmatprep.subr.mxu0 %v867
        %1244 = vmatpush1.msra.mxu0 %v866
        %1245 = vmatprep.subr.mxu0 %v859
        %1246 = vmatpush1.msra.mxu0 %v858
        %1247 = vmatprep.subr.mxu0 %v851
        %1248 = vmatpush1.msra.mxu0 %v850
        %1249 = vmatprep.subr.mxu0 0.0
        %1250 = vmatpush2.msra.mxu0 0.0
        %1251 = vmatprep.subr.mxu0 0.0
        %1252 = vmatpush2.msra.mxu0 0.0
        %1253 = vmatprep.subr.mxu0 0.0
        %1254 = vmatpush2.msra.mxu0 0.0
        %1255 = vmatprep.subr.mxu0 0.0
        %1256 = vmatpush2.msra.mxu0 0.0
        %1257 = vmatprep.subr.mxu0 0.0
        %1258 = vmatpush2.msra.mxu0 0.0
        %1259 = vmatprep.subr.mxu0 0.0
        %1260 = vmatpush2.msra.mxu0 0.0
        %1261 = vmatprep.subr.mxu0 0.0
        %1262 = vmatpush2.msra.mxu0 0.0
        %1263 = vmatprep.subr.mxu0 0.0
        %1264 = vmatpush2.msra.mxu0 0.0
        %1265 = vmatprep.subr.mxu0 0.0
        %1266 = vmatpush2.msra.mxu0 0.0
        %1267 = vmatprep.subr.mxu0 0.0
        %1268 = vmatpush2.msra.mxu0 0.0
        %1269 = vmatprep.subr.mxu0 0.0
        %1270 = vmatpush2.msra.mxu0 0.0
        %1271 = vmatprep.subr.mxu0 0.0
        %1272 = vmatpush2.msra.mxu0 0.0
        %1273 = vmatprep.subr.mxu0 0.0
        %1274 = vmatpush2.msra.mxu0 0.0
        %1275 = vmatprep.subr.mxu0 0.0
        %1276 = vmatpush2.msra.mxu0 0.0
        %1277 = vmatprep.subr.mxu0 0.0
        %1278 = vmatpush2.msra.mxu0 0.0
        %1279 = vmatprep.subr.mxu0 0.0
        %1280 = vmatpush2.msra.mxu0 0.0
        %1281 = vmatprep.mubr.f32.mxu0 0.0
        %1282 = vmatmul.mubr.f32.gmra.mxu0 %v968
        %v1283 = vpop.f32.mrf.mxu0
        %v1284 = vadd.f32 %v929, %v1283
        %v1285 = vpop.f32.mrf.mxu0
        %v1286 = vadd.f32 %v929, %v1285
        %1287 = vmatprep.mubr.f32.mxu0 0.0
        %1288 = vmatmul.mubr.f32.gmra.mxu0 %v971
        %v1289 = vpop.f32.mrf.mxu0
        %v1290 = vadd.f32 %v934, %v1289
        %v1291 = vpop.f32.mrf.mxu0
        %v1292 = vadd.f32 %v934, %v1291
        %1293 = vmatprep.mubr.f32.mxu0 0.0
        %1294 = vmatmul.mubr.f32.gmra.mxu0 %v974
        %v1295 = vpop.f32.mrf.mxu0
        %v1296 = vadd.f32 %v939, %v1295
        %v1297 = vpop.f32.mrf.mxu0
        %v1298 = vadd.f32 %v939, %v1297
        %1299 = vmatprep.mubr.f32.mxu0 0.0
        %1300 = vmatmul.mubr.f32.gmra.mxu0 %v977
        %v1301 = vpop.f32.mrf.mxu0
        %v1302 = vadd.f32 %v944, %v1301
        %v1303 = vpop.f32.mrf.mxu0
        %v1304 = vadd.f32 %v944, %v1303
        %1305 = vmatprep.mubr.f32.mxu0 0.0
        %1306 = vmatmul.mubr.f32.gmra.mxu0 %v980
        %v1307 = vpop.f32.mrf.mxu0
        %v1308 = vadd.f32 %v949, %v1307
        %v1309 = vpop.f32.mrf.mxu0
        %v1310 = vadd.f32 %v949, %v1309
        %1311 = vmatprep.mubr.f32.mxu0 0.0
        %1312 = vmatmul.mubr.f32.gmra.mxu0 %v983
        %v1313 = vpop.f32.mrf.mxu0
        %v1314 = vadd.f32 %v954, %v1313
        %v1315 = vpop.f32.mrf.mxu0
        %v1316 = vadd.f32 %v954, %v1315
        %1317 = vmatprep.mubr.f32.mxu0 0.0
        %1318 = vmatmul.mubr.f32.gmra.mxu0 %v986
        %v1319 = vpop.f32.mrf.mxu0
        %v1320 = vadd.f32 %v959, %v1319
        %v1321 = vpop.f32.mrf.mxu0
        %v1322 = vadd.f32 %v959, %v1321
        %1323 = vmatprep.mubr.f32.mxu0 0.0
        %1324 = vmatmul.mubr.f32.gmra.mxu0 %v989
        %v1325 = vpop.f32.mrf.mxu0
        %v1326 = vadd.f32 %v964, %v1325
        %v1327 = vpop.f32.mrf.mxu0
        %v1328 = vadd.f32 %v964, %v1327
        %1329 = vdwg.mxu0
        %1330 = vmatprep.subr.mxu0 0.0
        %1331 = vmatpush1.msra.mxu0 0.0
        %1332 = vmatprep.subr.mxu0 0.0
        %1333 = vmatpush1.msra.mxu0 0.0
        %1334 = vmatprep.subr.mxu0 0.0
        %1335 = vmatpush1.msra.mxu0 0.0
        %1336 = vmatprep.subr.mxu0 0.0
        %1337 = vmatpush1.msra.mxu0 0.0
        %1338 = vmatprep.subr.mxu0 0.0
        %1339 = vmatpush1.msra.mxu0 0.0
        %1340 = vmatprep.subr.mxu0 0.0
        %1341 = vmatpush1.msra.mxu0 0.0
        %1342 = vmatprep.subr.mxu0 0.0
        %1343 = vmatpush1.msra.mxu0 0.0
        %1344 = vmatprep.subr.mxu0 0.0
        %1345 = vmatpush1.msra.mxu0 0.0
        %1346 = vmatprep.subr.mxu0 %v909
        %1347 = vmatpush1.msra.mxu0 %v908
        %1348 = vmatprep.subr.mxu0 %v901
        %1349 = vmatpush1.msra.mxu0 %v900
        %1350 = vmatprep.subr.mxu0 %v893
        %1351 = vmatpush1.msra.mxu0 %v892
        %1352 = vmatprep.subr.mxu0 %v885
        %1353 = vmatpush1.msra.mxu0 %v884
        %1354 = vmatprep.subr.mxu0 %v877
        %1355 = vmatpush1.msra.mxu0 %v876
        %1356 = vmatprep.subr.mxu0 %v869
        %1357 = vmatpush1.msra.mxu0 %v868
        %1358 = vmatprep.subr.mxu0 %v861
        %1359 = vmatpush1.msra.mxu0 %v860
        %1360 = vmatprep.subr.mxu0 %v853
        %1361 = vmatpush1.msra.mxu0 %v852
        %1362 = vmatprep.subr.mxu0 0.0
        %1363 = vmatpush2.msra.mxu0 0.0
        %1364 = vmatprep.subr.mxu0 0.0
        %1365 = vmatpush2.msra.mxu0 0.0
        %1366 = vmatprep.subr.mxu0 0.0
        %1367 = vmatpush2.msra.mxu0 0.0
        %1368 = vmatprep.subr.mxu0 0.0
        %1369 = vmatpush2.msra.mxu0 0.0
        %1370 = vmatprep.subr.mxu0 0.0
        %1371 = vmatpush2.msra.mxu0 0.0
        %1372 = vmatprep.subr.mxu0 0.0
        %1373 = vmatpush2.msra.mxu0 0.0
        %1374 = vmatprep.subr.mxu0 0.0
        %1375 = vmatpush2.msra.mxu0 0.0
        %1376 = vmatprep.subr.mxu0 0.0
        %1377 = vmatpush2.msra.mxu0 0.0
        %1378 = vmatprep.subr.mxu0 0.0
        %1379 = vmatpush2.msra.mxu0 0.0
        %1380 = vmatprep.subr.mxu0 0.0
        %1381 = vmatpush2.msra.mxu0 0.0
        %1382 = vmatprep.subr.mxu0 0.0
        %1383 = vmatpush2.msra.mxu0 0.0
        %1384 = vmatprep.subr.mxu0 0.0
        %1385 = vmatpush2.msra.mxu0 0.0
        %1386 = vmatprep.subr.mxu0 0.0
        %1387 = vmatpush2.msra.mxu0 0.0
        %1388 = vmatprep.subr.mxu0 0.0
        %1389 = vmatpush2.msra.mxu0 0.0
        %1390 = vmatprep.subr.mxu0 0.0
        %1391 = vmatpush2.msra.mxu0 0.0
        %1392 = vmatprep.subr.mxu0 0.0
        %1393 = vmatpush2.msra.mxu0 0.0
        %1394 = vmatprep.mubr.f32.mxu0 0.0
        %1395 = vmatmul.mubr.f32.gmra.mxu0 %v968
        %v1396 = vpop.f32.mrf.mxu0
        %v1397 = vadd.f32 %v929, %v1396
        %v1398 = vpop.f32.mrf.mxu0
        %v1399 = vadd.f32 %v929, %v1398
        %1400 = vmatprep.mubr.f32.mxu0 0.0
        %1401 = vmatmul.mubr.f32.gmra.mxu0 %v971
        %v1402 = vpop.f32.mrf.mxu0
        %v1403 = vadd.f32 %v934, %v1402
        %v1404 = vpop.f32.mrf.mxu0
        %v1405 = vadd.f32 %v934, %v1404
        %1406 = vmatprep.mubr.f32.mxu0 0.0
        %1407 = vmatmul.mubr.f32.gmra.mxu0 %v974
        %v1408 = vpop.f32.mrf.mxu0
        %v1409 = vadd.f32 %v939, %v1408
        %v1410 = vpop.f32.mrf.mxu0
        %v1411 = vadd.f32 %v939, %v1410
        %1412 = vmatprep.mubr.f32.mxu0 0.0
        %1413 = vmatmul.mubr.f32.gmra.mxu0 %v977
        %v1414 = vpop.f32.mrf.mxu0
        %v1415 = vadd.f32 %v944, %v1414
        %v1416 = vpop.f32.mrf.mxu0
        %v1417 = vadd.f32 %v944, %v1416
        %1418 = vmatprep.mubr.f32.mxu0 0.0
        %1419 = vmatmul.mubr.f32.gmra.mxu0 %v980
        %v1420 = vpop.f32.mrf.mxu0
        %v1421 = vadd.f32 %v949, %v1420
        %v1422 = vpop.f32.mrf.mxu0
        %v1423 = vadd.f32 %v949, %v1422
        %1424 = vmatprep.mubr.f32.mxu0 0.0
        %1425 = vmatmul.mubr.f32.gmra.mxu0 %v983
        %v1426 = vpop.f32.mrf.mxu0
        %v1427 = vadd.f32 %v954, %v1426
        %v1428 = vpop.f32.mrf.mxu0
        %v1429 = vadd.f32 %v954, %v1428
        %1430 = vmatprep.mubr.f32.mxu0 0.0
        %1431 = vmatmul.mubr.f32.gmra.mxu0 %v986
        %v1432 = vpop.f32.mrf.mxu0
        %v1433 = vadd.f32 %v959, %v1432
        %v1434 = vpop.f32.mrf.mxu0
        %v1435 = vadd.f32 %v959, %v1434
        %1436 = vmatprep.mubr.f32.mxu0 0.0
        %1437 = vmatmul.mubr.f32.gmra.mxu0 %v989
        %v1438 = vpop.f32.mrf.mxu0
        %v1439 = vadd.f32 %v964, %v1438
        %v1440 = vpop.f32.mrf.mxu0
        %v1441 = vadd.f32 %v964, %v1440
        %1442 = vdwg.mxu0
        %v1443 = vmax.f32 %v1058, 0.0
        %v1444 = vmax.f32 %v1060, 0.0
        %v1445 = vmax.f32 %v1171, 0.0
        %v1446 = vmax.f32 %v1173, 0.0
        %v1447 = vmax.f32 %v1284, 0.0
        %v1448 = vmax.f32 %v1286, 0.0
        %v1449 = vmax.f32 %v1397, 0.0
        %v1450 = vmax.f32 %v1399, 0.0
        %v1451 = vmax.f32 %v1064, 0.0
        %v1452 = vmax.f32 %v1066, 0.0
        %v1453 = vmax.f32 %v1177, 0.0
        %v1454 = vmax.f32 %v1179, 0.0
        %v1455 = vmax.f32 %v1290, 0.0
        %v1456 = vmax.f32 %v1292, 0.0
        %v1457 = vmax.f32 %v1403, 0.0
        %v1458 = vmax.f32 %v1405, 0.0
        %v1459 = vmax.f32 %v1070, 0.0
        %v1460 = vmax.f32 %v1072, 0.0
        %v1461 = vmax.f32 %v1183, 0.0
        %v1462 = vmax.f32 %v1185, 0.0
        %v1463 = vmax.f32 %v1296, 0.0
        %v1464 = vmax.f32 %v1298, 0.0
        %v1465 = vmax.f32 %v1409, 0.0
        %v1466 = vmax.f32 %v1411, 0.0
        %v1467 = vmax.f32 %v1076, 0.0
        %v1468 = vmax.f32 %v1078, 0.0
        %v1469 = vmax.f32 %v1189, 0.0
        %v1470 = vmax.f32 %v1191, 0.0
        %v1471 = vmax.f32 %v1302, 0.0
        %v1472 = vmax.f32 %v1304, 0.0
        %v1473 = vmax.f32 %v1415, 0.0
        %v1474 = vmax.f32 %v1417, 0.0
        %v1475 = vmax.f32 %v1082, 0.0
        %v1476 = vmax.f32 %v1084, 0.0
        %v1477 = vmax.f32 %v1195, 0.0
        %v1478 = vmax.f32 %v1197, 0.0
        %v1479 = vmax.f32 %v1308, 0.0
        %v1480 = vmax.f32 %v1310, 0.0
        %v1481 = vmax.f32 %v1421, 0.0
        %v1482 = vmax.f32 %v1423, 0.0
        %v1483 = vmax.f32 %v1088, 0.0
        %v1484 = vmax.f32 %v1090, 0.0
        %v1485 = vmax.f32 %v1201, 0.0
        %v1486 = vmax.f32 %v1203, 0.0
        %v1487 = vmax.f32 %v1314, 0.0
        %v1488 = vmax.f32 %v1316, 0.0
        %v1489 = vmax.f32 %v1427, 0.0
        %v1490 = vmax.f32 %v1429, 0.0
        %v1491 = vmax.f32 %v1094, 0.0
        %v1492 = vmax.f32 %v1096, 0.0
        %v1493 = vmax.f32 %v1207, 0.0
        %v1494 = vmax.f32 %v1209, 0.0
        %v1495 = vmax.f32 %v1320, 0.0
        %v1496 = vmax.f32 %v1322, 0.0
        %v1497 = vmax.f32 %v1433, 0.0
        %v1498 = vmax.f32 %v1435, 0.0
        %v1499 = vmax.f32 %v1100, 0.0
        %v1500 = vmax.f32 %v1102, 0.0
        %v1501 = vmax.f32 %v1213, 0.0
        %v1502 = vmax.f32 %v1215, 0.0
        %v1503 = vmax.f32 %v1326, 0.0
        %v1504 = vmax.f32 %v1328, 0.0
        %v1505 = vmax.f32 %v1439, 0.0
        %v1506 = vmax.f32 %v1441, 0.0
        %v1507 = vld [vmem:[%s6] sm:$0xff]
        %v1508 = vld [vmem:[%s6 + $0x8] sm:$0xff]
        %v1509 = vld [vmem:[%s6 + $0x10] sm:$0xff]
        %v1510 = vld [vmem:[%s6 + $0x18] sm:$0xff]
        %v1511 = vld [vmem:[%s6 + $0x20] sm:$0xff]
        %v1512 = vld [vmem:[%s6 + $0x28] sm:$0xff]
        %v1513 = vld [vmem:[%s6 + $0x30] sm:$0xff]
        %v1514 = vld [vmem:[%s6 + $0x38] sm:$0xff]
        %v1515 = vld [vmem:[%s7] sm:$0xff]
        %v1516 = vld [vmem:[%s7 + $0x8] sm:$0xff]
        %v1517 = vld [vmem:[%s7 + $0x10] sm:$0xff]
        %v1518 = vld [vmem:[%s7 + $0x18] sm:$0xff]
        %v1519 = vld [vmem:[%s7 + $0x20] sm:$0xff]
        %v1520 = vld [vmem:[%s7 + $0x28] sm:$0xff]
        %v1521 = vld [vmem:[%s7 + $0x30] sm:$0xff]
        %v1522 = vld [vmem:[%s7 + $0x38] sm:$0xff]
        %1524 = vset.pattern.permute.xlu0 0
        %1525 = vperm.xlu0 %1524, %v1515
        %v1526 = vpop.permute.xlu0 %1525
        %1529 = vset.pattern.permute.xlu0 0
        %1530 = vperm.xlu0 %1529, %v1516
        %v1531 = vpop.permute.xlu0 %1530
        %1534 = vset.pattern.permute.xlu0 0
        %1535 = vperm.xlu0 %1534, %v1517
        %v1536 = vpop.permute.xlu0 %1535
        %1539 = vset.pattern.permute.xlu0 0
        %1540 = vperm.xlu0 %1539, %v1518
        %v1541 = vpop.permute.xlu0 %1540
        %1544 = vset.pattern.permute.xlu0 0
        %1545 = vperm.xlu0 %1544, %v1519
        %v1546 = vpop.permute.xlu0 %1545
        %1549 = vset.pattern.permute.xlu0 0
        %1550 = vperm.xlu0 %1549, %v1520
        %v1551 = vpop.permute.xlu0 %1550
        %1554 = vset.pattern.permute.xlu0 0
        %1555 = vperm.xlu0 %1554, %v1521
        %v1556 = vpop.permute.xlu0 %1555
        %1559 = vset.pattern.permute.xlu0 0
        %1560 = vperm.xlu0 %1559, %v1522
        %v1561 = vpop.permute.xlu0 %1560
        %v1564 = vsel %vm966, %v1507, 0
        %v1567 = vsel %vm966, %v1508, 0
        %v1570 = vsel %vm966, %v1509, 0
        %v1573 = vsel %vm966, %v1510, 0
        %v1576 = vsel %vm966, %v1511, 0
        %v1579 = vsel %vm966, %v1512, 0
        %v1582 = vsel %vm966, %v1513, 0
        %v1585 = vsel %vm966, %v1514, 0
        %1587 = vmatprep.subr.mxu0 0.0
        %1588 = vmatpush1.msra.mxu0 0.0
        %1589 = vmatprep.subr.mxu0 0.0
        %1590 = vmatpush1.msra.mxu0 0.0
        %1591 = vmatprep.subr.mxu0 0.0
        %1592 = vmatpush1.msra.mxu0 0.0
        %1593 = vmatprep.subr.mxu0 0.0
        %1594 = vmatpush1.msra.mxu0 0.0
        %1595 = vmatprep.subr.mxu0 0.0
        %1596 = vmatpush1.msra.mxu0 0.0
        %1597 = vmatprep.subr.mxu0 0.0
        %1598 = vmatpush1.msra.mxu0 0.0
        %1599 = vmatprep.subr.mxu0 0.0
        %1600 = vmatpush1.msra.mxu0 0.0
        %1601 = vmatprep.subr.mxu0 0.0
        %1602 = vmatpush1.msra.mxu0 0.0
        %1603 = vmatprep.subr.mxu0 %v1500
        %1604 = vmatpush1.msra.mxu0 %v1499
        %1605 = vmatprep.subr.mxu0 %v1492
        %1606 = vmatpush1.msra.mxu0 %v1491
        %1607 = vmatprep.subr.mxu0 %v1484
        %1608 = vmatpush1.msra.mxu0 %v1483
        %1609 = vmatprep.subr.mxu0 %v1476
        %1610 = vmatpush1.msra.mxu0 %v1475
        %1611 = vmatprep.subr.mxu0 %v1468
        %1612 = vmatpush1.msra.mxu0 %v1467
        %1613 = vmatprep.subr.mxu0 %v1460
        %1614 = vmatpush1.msra.mxu0 %v1459
        %1615 = vmatprep.subr.mxu0 %v1452
        %1616 = vmatpush1.msra.mxu0 %v1451
        %1617 = vmatprep.subr.mxu0 %v1444
        %1618 = vmatpush1.msra.mxu0 %v1443
        %1619 = vmatprep.subr.mxu0 0.0
        %1620 = vmatpush2.msra.mxu0 0.0
        %1621 = vmatprep.subr.mxu0 0.0
        %1622 = vmatpush2.msra.mxu0 0.0
        %1623 = vmatprep.subr.mxu0 0.0
        %1624 = vmatpush2.msra.mxu0 0.0
        %1625 = vmatprep.subr.mxu0 0.0
        %1626 = vmatpush2.msra.mxu0 0.0
        %1627 = vmatprep.subr.mxu0 0.0
        %1628 = vmatpush2.msra.mxu0 0.0
        %1629 = vmatprep.subr.mxu0 0.0
        %1630 = vmatpush2.msra.mxu0 0.0
        %1631 = vmatprep.subr.mxu0 0.0
        %1632 = vmatpush2.msra.mxu0 0.0
        %1633 = vmatprep.subr.mxu0 0.0
        %1634 = vmatpush2.msra.mxu0 0.0
        %1635 = vmatprep.subr.mxu0 0.0
        %1636 = vmatpush2.msra.mxu0 0.0
        %1637 = vmatprep.subr.mxu0 0.0
        %1638 = vmatpush2.msra.mxu0 0.0
        %1639 = vmatprep.subr.mxu0 0.0
        %1640 = vmatpush2.msra.mxu0 0.0
        %1641 = vmatprep.subr.mxu0 0.0
        %1642 = vmatpush2.msra.mxu0 0.0
        %1643 = vmatprep.subr.mxu0 0.0
        %1644 = vmatpush2.msra.mxu0 0.0
        %1645 = vmatprep.subr.mxu0 0.0
        %1646 = vmatpush2.msra.mxu0 0.0
        %1647 = vmatprep.subr.mxu0 0.0
        %1648 = vmatpush2.msra.mxu0 0.0
        %1649 = vmatprep.subr.mxu0 0.0
        %1650 = vmatpush2.msra.mxu0 0.0
        %1651 = vmatprep.mubr.f32.mxu0 0.0
        %1652 = vmatmul.mubr.f32.gmra.mxu0 %v1564
        %v1653 = vpop.f32.mrf.mxu0
        %v1654 = vadd.f32 %v1526, %v1653
        %v1655 = vpop.f32.mrf.mxu0
        %v1656 = vadd.f32 %v1526, %v1655
        %1657 = vmatprep.mubr.f32.mxu0 0.0
        %1658 = vmatmul.mubr.f32.gmra.mxu0 %v1567
        %v1659 = vpop.f32.mrf.mxu0
        %v1660 = vadd.f32 %v1531, %v1659
        %v1661 = vpop.f32.mrf.mxu0
        %v1662 = vadd.f32 %v1531, %v1661
        %1663 = vmatprep.mubr.f32.mxu0 0.0
        %1664 = vmatmul.mubr.f32.gmra.mxu0 %v1570
        %v1665 = vpop.f32.mrf.mxu0
        %v1666 = vadd.f32 %v1536, %v1665
        %v1667 = vpop.f32.mrf.mxu0
        %v1668 = vadd.f32 %v1536, %v1667
        %1669 = vmatprep.mubr.f32.mxu0 0.0
        %1670 = vmatmul.mubr.f32.gmra.mxu0 %v1573
        %v1671 = vpop.f32.mrf.mxu0
        %v1672 = vadd.f32 %v1541, %v1671
        %v1673 = vpop.f32.mrf.mxu0
        %v1674 = vadd.f32 %v1541, %v1673
        %1675 = vmatprep.mubr.f32.mxu0 0.0
        %1676 = vmatmul.mubr.f32.gmra.mxu0 %v1576
        %v1677 = vpop.f32.mrf.mxu0
        %v1678 = vadd.f32 %v1546, %v1677
        %v1679 = vpop.f32.mrf.mxu0
        %v1680 = vadd.f32 %v1546, %v1679
        %1681 = vmatprep.mubr.f32.mxu0 0.0
        %1682 = vmatmul.mubr.f32.gmra.mxu0 %v1579
        %v1683 = vpop.f32.mrf.mxu0
        %v1684 = vadd.f32 %v1551, %v1683
        %v1685 = vpop.f32.mrf.mxu0
        %v1686 = vadd.f32 %v1551, %v1685
        %1687 = vmatprep.mubr.f32.mxu0 0.0
        %1688 = vmatmul.mubr.f32.gmra.mxu0 %v1582
        %v1689 = vpop.f32.mrf.mxu0
        %v1690 = vadd.f32 %v1556, %v1689
        %v1691 = vpop.f32.mrf.mxu0
        %v1692 = vadd.f32 %v1556, %v1691
        %1693 = vmatprep.mubr.f32.mxu0 0.0
        %1694 = vmatmul.mubr.f32.gmra.mxu0 %v1585
        %v1695 = vpop.f32.mrf.mxu0
        %v1696 = vadd.f32 %v1561, %v1695
        %v1697 = vpop.f32.mrf.mxu0
        %v1698 = vadd.f32 %v1561, %v1697
        %1699 = vdwg.mxu0
        %1700 = vmatprep.subr.mxu0 0.0
        %1701 = vmatpush1.msra.mxu0 0.0
        %1702 = vmatprep.subr.mxu0 0.0
        %1703 = vmatpush1.msra.mxu0 0.0
        %1704 = vmatprep.subr.mxu0 0.0
        %1705 = vmatpush1.msra.mxu0 0.0
        %1706 = vmatprep.subr.mxu0 0.0
        %1707 = vmatpush1.msra.mxu0 0.0
        %1708 = vmatprep.subr.mxu0 0.0
        %1709 = vmatpush1.msra.mxu0 0.0
        %1710 = vmatprep.subr.mxu0 0.0
        %1711 = vmatpush1.msra.mxu0 0.0
        %1712 = vmatprep.subr.mxu0 0.0
        %1713 = vmatpush1.msra.mxu0 0.0
        %1714 = vmatprep.subr.mxu0 0.0
        %1715 = vmatpush1.msra.mxu0 0.0
        %1716 = vmatprep.subr.mxu0 %v1502
        %1717 = vmatpush1.msra.mxu0 %v1501
        %1718 = vmatprep.subr.mxu0 %v1494
        %1719 = vmatpush1.msra.mxu0 %v1493
        %1720 = vmatprep.subr.mxu0 %v1486
        %1721 = vmatpush1.msra.mxu0 %v1485
        %1722 = vmatprep.subr.mxu0 %v1478
        %1723 = vmatpush1.msra.mxu0 %v1477
        %1724 = vmatprep.subr.mxu0 %v1470
        %1725 = vmatpush1.msra.mxu0 %v1469
        %1726 = vmatprep.subr.mxu0 %v1462
        %1727 = vmatpush1.msra.mxu0 %v1461
        %1728 = vmatprep.subr.mxu0 %v1454
        %1729 = vmatpush1.msra.mxu0 %v1453
        %1730 = vmatprep.subr.mxu0 %v1446
        %1731 = vmatpush1.msra.mxu0 %v1445
        %1732 = vmatprep.subr.mxu0 0.0
        %1733 = vmatpush2.msra.mxu0 0.0
        %1734 = vmatprep.subr.mxu0 0.0
        %1735 = vmatpush2.msra.mxu0 0.0
        %1736 = vmatprep.subr.mxu0 0.0
        %1737 = vmatpush2.msra.mxu0 0.0
        %1738 = vmatprep.subr.mxu0 0.0
        %1739 = vmatpush2.msra.mxu0 0.0
        %1740 = vmatprep.subr.mxu0 0.0
        %1741 = vmatpush2.msra.mxu0 0.0
        %1742 = vmatprep.subr.mxu0 0.0
        %1743 = vmatpush2.msra.mxu0 0.0
        %1744 = vmatprep.subr.mxu0 0.0
        %1745 = vmatpush2.msra.mxu0 0.0
        %1746 = vmatprep.subr.mxu0 0.0
        %1747 = vmatpush2.msra.mxu0 0.0
        %1748 = vmatprep.subr.mxu0 0.0
        %1749 = vmatpush2.msra.mxu0 0.0
        %1750 = vmatprep.subr.mxu0 0.0
        %1751 = vmatpush2.msra.mxu0 0.0
        %1752 = vmatprep.subr.mxu0 0.0
        %1753 = vmatpush2.msra.mxu0 0.0
        %1754 = vmatprep.subr.mxu0 0.0
        %1755 = vmatpush2.msra.mxu0 0.0
        %1756 = vmatprep.subr.mxu0 0.0
        %1757 = vmatpush2.msra.mxu0 0.0
        %1758 = vmatprep.subr.mxu0 0.0
        %1759 = vmatpush2.msra.mxu0 0.0
        %1760 = vmatprep.subr.mxu0 0.0
        %1761 = vmatpush2.msra.mxu0 0.0
        %1762 = vmatprep.subr.mxu0 0.0
        %1763 = vmatpush2.msra.mxu0 0.0
        %1764 = vmatprep.mubr.f32.mxu0 0.0
        %1765 = vmatmul.mubr.f32.gmra.mxu0 %v1564
        %v1766 = vpop.f32.mrf.mxu0
        %v1767 = vadd.f32 %v1526, %v1766
        %v1768 = vpop.f32.mrf.mxu0
        %v1769 = vadd.f32 %v1526, %v1768
        %1770 = vmatprep.mubr.f32.mxu0 0.0
        %1771 = vmatmul.mubr.f32.gmra.mxu0 %v1567
        %v1772 = vpop.f32.mrf.mxu0
        %v1773 = vadd.f32 %v1531, %v1772
        %v1774 = vpop.f32.mrf.mxu0
        %v1775 = vadd.f32 %v1531, %v1774
        %1776 = vmatprep.mubr.f32.mxu0 0.0
        %1777 = vmatmul.mubr.f32.gmra.mxu0 %v1570
        %v1778 = vpop.f32.mrf.mxu0
        %v1779 = vadd.f32 %v1536, %v1778
        %v1780 = vpop.f32.mrf.mxu0
        %v1781 = vadd.f32 %v1536, %v1780
        %1782 = vmatprep.mubr.f32.mxu0 0.0
        %1783 = vmatmul.mubr.f32.gmra.mxu0 %v1573
        %v1784 = vpop.f32.mrf.mxu0
        %v1785 = vadd.f32 %v1541, %v1784
        %v1786 = vpop.f32.mrf.mxu0
        %v1787 = vadd.f32 %v1541, %v1786
        %1788 = vmatprep.mubr.f32.mxu0 0.0
        %1789 = vmatmul.mubr.f32.gmra.mxu0 %v1576
        %v1790 = vpop.f32.mrf.mxu0
        %v1791 = vadd.f32 %v1546, %v1790
        %v1792 = vpop.f32.mrf.mxu0
        %v1793 = vadd.f32 %v1546, %v1792
        %1794 = vmatprep.mubr.f32.mxu0 0.0
        %1795 = vmatmul.mubr.f32.gmra.mxu0 %v1579
        %v1796 = vpop.f32.mrf.mxu0
        %v1797 = vadd.f32 %v1551, %v1796
        %v1798 = vpop.f32.mrf.mxu0
        %v1799 = vadd.f32 %v1551, %v1798
        %1800 = vmatprep.mubr.f32.mxu0 0.0
        %1801 = vmatmul.mubr.f32.gmra.mxu0 %v1582
        %v1802 = vpop.f32.mrf.mxu0
        %v1803 = vadd.f32 %v1556, %v1802
        %v1804 = vpop.f32.mrf.mxu0
        %v1805 = vadd.f32 %v1556, %v1804
        %1806 = vmatprep.mubr.f32.mxu0 0.0
        %1807 = vmatmul.mubr.f32.gmra.mxu0 %v1585
        %v1808 = vpop.f32.mrf.mxu0
        %v1809 = vadd.f32 %v1561, %v1808
        %v1810 = vpop.f32.mrf.mxu0
        %v1811 = vadd.f32 %v1561, %v1810
        %1812 = vdwg.mxu0
        %1813 = vmatprep.subr.mxu0 0.0
        %1814 = vmatpush1.msra.mxu0 0.0
        %1815 = vmatprep.subr.mxu0 0.0
        %1816 = vmatpush1.msra.mxu0 0.0
        %1817 = vmatprep.subr.mxu0 0.0
        %1818 = vmatpush1.msra.mxu0 0.0
        %1819 = vmatprep.subr.mxu0 0.0
        %1820 = vmatpush1.msra.mxu0 0.0
        %1821 = vmatprep.subr.mxu0 0.0
        %1822 = vmatpush1.msra.mxu0 0.0
        %1823 = vmatprep.subr.mxu0 0.0
        %1824 = vmatpush1.msra.mxu0 0.0
        %1825 = vmatprep.subr.mxu0 0.0
        %1826 = vmatpush1.msra.mxu0 0.0
        %1827 = vmatprep.subr.mxu0 0.0
        %1828 = vmatpush1.msra.mxu0 0.0
        %1829 = vmatprep.subr.mxu0 %v1504
        %1830 = vmatpush1.msra.mxu0 %v1503
        %1831 = vmatprep.subr.mxu0 %v1496
        %1832 = vmatpush1.msra.mxu0 %v1495
        %1833 = vmatprep.subr.mxu0 %v1488
        %1834 = vmatpush1.msra.mxu0 %v1487
        %1835 = vmatprep.subr.mxu0 %v1480
        %1836 = vmatpush1.msra.mxu0 %v1479
        %1837 = vmatprep.subr.mxu0 %v1472
        %1838 = vmatpush1.msra.mxu0 %v1471
        %1839 = vmatprep.subr.mxu0 %v1464
        %1840 = vmatpush1.msra.mxu0 %v1463
        %1841 = vmatprep.subr.mxu0 %v1456
        %1842 = vmatpush1.msra.mxu0 %v1455
        %1843 = vmatprep.subr.mxu0 %v1448
        %1844 = vmatpush1.msra.mxu0 %v1447
        %1845 = vmatprep.subr.mxu0 0.0
        %1846 = vmatpush2.msra.mxu0 0.0
        %1847 = vmatprep.subr.mxu0 0.0
        %1848 = vmatpush2.msra.mxu0 0.0
        %1849 = vmatprep.subr.mxu0 0.0
        %1850 = vmatpush2.msra.mxu0 0.0
        %1851 = vmatprep.subr.mxu0 0.0
        %1852 = vmatpush2.msra.mxu0 0.0
        %1853 = vmatprep.subr.mxu0 0.0
        %1854 = vmatpush2.msra.mxu0 0.0
        %1855 = vmatprep.subr.mxu0 0.0
        %1856 = vmatpush2.msra.mxu0 0.0
        %1857 = vmatprep.subr.mxu0 0.0
        %1858 = vmatpush2.msra.mxu0 0.0
        %1859 = vmatprep.subr.mxu0 0.0
        %1860 = vmatpush2.msra.mxu0 0.0
        %1861 = vmatprep.subr.mxu0 0.0
        %1862 = vmatpush2.msra.mxu0 0.0
        %1863 = vmatprep.subr.mxu0 0.0
        %1864 = vmatpush2.msra.mxu0 0.0
        %1865 = vmatprep.subr.mxu0 0.0
        %1866 = vmatpush2.msra.mxu0 0.0
        %1867 = vmatprep.subr.mxu0 0.0
        %1868 = vmatpush2.msra.mxu0 0.0
        %1869 = vmatprep.subr.mxu0 0.0
        %1870 = vmatpush2.msra.mxu0 0.0
        %1871 = vmatprep.subr.mxu0 0.0
        %1872 = vmatpush2.msra.mxu0 0.0
        %1873 = vmatprep.subr.mxu0 0.0
        %1874 = vmatpush2.msra.mxu0 0.0
        %1875 = vmatprep.subr.mxu0 0.0
        %1876 = vmatpush2.msra.mxu0 0.0
        %1877 = vmatprep.mubr.f32.mxu0 0.0
        %1878 = vmatmul.mubr.f32.gmra.mxu0 %v1564
        %v1879 = vpop.f32.mrf.mxu0
        %v1880 = vadd.f32 %v1526, %v1879
        %v1881 = vpop.f32.mrf.mxu0
        %v1882 = vadd.f32 %v1526, %v1881
        %1883 = vmatprep.mubr.f32.mxu0 0.0
        %1884 = vmatmul.mubr.f32.gmra.mxu0 %v1567
        %v1885 = vpop.f32.mrf.mxu0
        %v1886 = vadd.f32 %v1531, %v1885
        %v1887 = vpop.f32.mrf.mxu0
        %v1888 = vadd.f32 %v1531, %v1887
        %1889 = vmatprep.mubr.f32.mxu0 0.0
        %1890 = vmatmul.mubr.f32.gmra.mxu0 %v1570
        %v1891 = vpop.f32.mrf.mxu0
        %v1892 = vadd.f32 %v1536, %v1891
        %v1893 = vpop.f32.mrf.mxu0
        %v1894 = vadd.f32 %v1536, %v1893
        %1895 = vmatprep.mubr.f32.mxu0 0.0
        %1896 = vmatmul.mubr.f32.gmra.mxu0 %v1573
        %v1897 = vpop.f32.mrf.mxu0
        %v1898 = vadd.f32 %v1541, %v1897
        %v1899 = vpop.f32.mrf.mxu0
        %v1900 = vadd.f32 %v1541, %v1899
        %1901 = vmatprep.mubr.f32.mxu0 0.0
        %1902 = vmatmul.mubr.f32.gmra.mxu0 %v1576
        %v1903 = vpop.f32.mrf.mxu0
        %v1904 = vadd.f32 %v1546, %v1903
        %v1905 = vpop.f32.mrf.mxu0
        %v1906 = vadd.f32 %v1546, %v1905
        %1907 = vmatprep.mubr.f32.mxu0 0.0
        %1908 = vmatmul.mubr.f32.gmra.mxu0 %v1579
        %v1909 = vpop.f32.mrf.mxu0
        %v1910 = vadd.f32 %v1551, %v1909
        %v1911 = vpop.f32.mrf.mxu0
        %v1912 = vadd.f32 %v1551, %v1911
        %1913 = vmatprep.mubr.f32.mxu0 0.0
        %1914 = vmatmul.mubr.f32.gmra.mxu0 %v1582
        %v1915 = vpop.f32.mrf.mxu0
        %v1916 = vadd.f32 %v1556, %v1915
        %v1917 = vpop.f32.mrf.mxu0
        %v1918 = vadd.f32 %v1556, %v1917
        %1919 = vmatprep.mubr.f32.mxu0 0.0
        %1920 = vmatmul.mubr.f32.gmra.mxu0 %v1585
        %v1921 = vpop.f32.mrf.mxu0
        %v1922 = vadd.f32 %v1561, %v1921
        %v1923 = vpop.f32.mrf.mxu0
        %v1924 = vadd.f32 %v1561, %v1923
        %1925 = vdwg.mxu0
        %1926 = vmatprep.subr.mxu0 0.0
        %1927 = vmatpush1.msra.mxu0 0.0
        %1928 = vmatprep.subr.mxu0 0.0
        %1929 = vmatpush1.msra.mxu0 0.0
        %1930 = vmatprep.subr.mxu0 0.0
        %1931 = vmatpush1.msra.mxu0 0.0
        %1932 = vmatprep.subr.mxu0 0.0
        %1933 = vmatpush1.msra.mxu0 0.0
        %1934 = vmatprep.subr.mxu0 0.0
        %1935 = vmatpush1.msra.mxu0 0.0
        %1936 = vmatprep.subr.mxu0 0.0
        %1937 = vmatpush1.msra.mxu0 0.0
        %1938 = vmatprep.subr.mxu0 0.0
        %1939 = vmatpush1.msra.mxu0 0.0
        %1940 = vmatprep.subr.mxu0 0.0
        %1941 = vmatpush1.msra.mxu0 0.0
        %1942 = vmatprep.subr.mxu0 %v1506
        %1943 = vmatpush1.msra.mxu0 %v1505
        %1944 = vmatprep.subr.mxu0 %v1498
        %1945 = vmatpush1.msra.mxu0 %v1497
        %1946 = vmatprep.subr.mxu0 %v1490
        %1947 = vmatpush1.msra.mxu0 %v1489
        %1948 = vmatprep.subr.mxu0 %v1482
        %1949 = vmatpush1.msra.mxu0 %v1481
        %1950 = vmatprep.subr.mxu0 %v1474
        %1951 = vmatpush1.msra.mxu0 %v1473
        %1952 = vmatprep.subr.mxu0 %v1466
        %1953 = vmatpush1.msra.mxu0 %v1465
        %1954 = vmatprep.subr.mxu0 %v1458
        %1955 = vmatpush1.msra.mxu0 %v1457
        %1956 = vmatprep.subr.mxu0 %v1450
        %1957 = vmatpush1.msra.mxu0 %v1449
        %1958 = vmatprep.subr.mxu0 0.0
        %1959 = vmatpush2.msra.mxu0 0.0
        %1960 = vmatprep.subr.mxu0 0.0
        %1961 = vmatpush2.msra.mxu0 0.0
        %1962 = vmatprep.subr.mxu0 0.0
        %1963 = vmatpush2.msra.mxu0 0.0
        %1964 = vmatprep.subr.mxu0 0.0
        %1965 = vmatpush2.msra.mxu0 0.0
        %1966 = vmatprep.subr.mxu0 0.0
        %1967 = vmatpush2.msra.mxu0 0.0
        %1968 = vmatprep.subr.mxu0 0.0
        %1969 = vmatpush2.msra.mxu0 0.0
        %1970 = vmatprep.subr.mxu0 0.0
        %1971 = vmatpush2.msra.mxu0 0.0
        %1972 = vmatprep.subr.mxu0 0.0
        %1973 = vmatpush2.msra.mxu0 0.0
        %1974 = vmatprep.subr.mxu0 0.0
        %1975 = vmatpush2.msra.mxu0 0.0
        %1976 = vmatprep.subr.mxu0 0.0
        %1977 = vmatpush2.msra.mxu0 0.0
        %1978 = vmatprep.subr.mxu0 0.0
        %1979 = vmatpush2.msra.mxu0 0.0
        %1980 = vmatprep.subr.mxu0 0.0
        %1981 = vmatpush2.msra.mxu0 0.0
        %1982 = vmatprep.subr.mxu0 0.0
        %1983 = vmatpush2.msra.mxu0 0.0
        %1984 = vmatprep.subr.mxu0 0.0
        %1985 = vmatpush2.msra.mxu0 0.0
        %1986 = vmatprep.subr.mxu0 0.0
        %1987 = vmatpush2.msra.mxu0 0.0
        %1988 = vmatprep.subr.mxu0 0.0
        %1989 = vmatpush2.msra.mxu0 0.0
        %1990 = vmatprep.mubr.f32.mxu0 0.0
        %1991 = vmatmul.mubr.f32.gmra.mxu0 %v1564
        %v1992 = vpop.f32.mrf.mxu0
        %v1993 = vadd.f32 %v1526, %v1992
        %v1994 = vpop.f32.mrf.mxu0
        %v1995 = vadd.f32 %v1526, %v1994
        %1996 = vmatprep.mubr.f32.mxu0 0.0
        %1997 = vmatmul.mubr.f32.gmra.mxu0 %v1567
        %v1998 = vpop.f32.mrf.mxu0
        %v1999 = vadd.f32 %v1531, %v1998
        %v2000 = vpop.f32.mrf.mxu0
        %v2001 = vadd.f32 %v1531, %v2000
        %2002 = vmatprep.mubr.f32.mxu0 0.0
        %2003 = vmatmul.mubr.f32.gmra.mxu0 %v1570
        %v2004 = vpop.f32.mrf.mxu0
        %v2005 = vadd.f32 %v1536, %v2004
        %v2006 = vpop.f32.mrf.mxu0
        %v2007 = vadd.f32 %v1536, %v2006
        %2008 = vmatprep.mubr.f32.mxu0 0.0
        %2009 = vmatmul.mubr.f32.gmra.mxu0 %v1573
        %v2010 = vpop.f32.mrf.mxu0
        %v2011 = vadd.f32 %v1541, %v2010
        %v2012 = vpop.f32.mrf.mxu0
        %v2013 = vadd.f32 %v1541, %v2012
        %2014 = vmatprep.mubr.f32.mxu0 0.0
        %2015 = vmatmul.mubr.f32.gmra.mxu0 %v1576
        %v2016 = vpop.f32.mrf.mxu0
        %v2017 = vadd.f32 %v1546, %v2016
        %v2018 = vpop.f32.mrf.mxu0
        %v2019 = vadd.f32 %v1546, %v2018
        %2020 = vmatprep.mubr.f32.mxu0 0.0
        %2021 = vmatmul.mubr.f32.gmra.mxu0 %v1579
        %v2022 = vpop.f32.mrf.mxu0
        %v2023 = vadd.f32 %v1551, %v2022
        %v2024 = vpop.f32.mrf.mxu0
        %v2025 = vadd.f32 %v1551, %v2024
        %2026 = vmatprep.mubr.f32.mxu0 0.0
        %2027 = vmatmul.mubr.f32.gmra.mxu0 %v1582
        %v2028 = vpop.f32.mrf.mxu0
        %v2029 = vadd.f32 %v1556, %v2028
        %v2030 = vpop.f32.mrf.mxu0
        %v2031 = vadd.f32 %v1556, %v2030
        %2032 = vmatprep.mubr.f32.mxu0 0.0
        %2033 = vmatmul.mubr.f32.gmra.mxu0 %v1585
        %v2034 = vpop.f32.mrf.mxu0
        %v2035 = vadd.f32 %v1561, %v2034
        %v2036 = vpop.f32.mrf.mxu0
        %v2037 = vadd.f32 %v1561, %v2036
        %2038 = vdwg.mxu0
        %v2039 = vmax.f32 %v1654, 0.0
        %v2040 = vmax.f32 %v1656, 0.0
        %v2041 = vmax.f32 %v1767, 0.0
        %v2042 = vmax.f32 %v1769, 0.0
        %v2043 = vmax.f32 %v1880, 0.0
        %v2044 = vmax.f32 %v1882, 0.0
        %v2045 = vmax.f32 %v1993, 0.0
        %v2046 = vmax.f32 %v1995, 0.0
        %v2047 = vmax.f32 %v1660, 0.0
        %v2048 = vmax.f32 %v1662, 0.0
        %v2049 = vmax.f32 %v1773, 0.0
        %v2050 = vmax.f32 %v1775, 0.0
        %v2051 = vmax.f32 %v1886, 0.0
        %v2052 = vmax.f32 %v1888, 0.0
        %v2053 = vmax.f32 %v1999, 0.0
        %v2054 = vmax.f32 %v2001, 0.0
        %v2055 = vmax.f32 %v1666, 0.0
        %v2056 = vmax.f32 %v1668, 0.0
        %v2057 = vmax.f32 %v1779, 0.0
        %v2058 = vmax.f32 %v1781, 0.0
        %v2059 = vmax.f32 %v1892, 0.0
        %v2060 = vmax.f32 %v1894, 0.0
        %v2061 = vmax.f32 %v2005, 0.0
        %v2062 = vmax.f32 %v2007, 0.0
        %v2063 = vmax.f32 %v1672, 0.0
        %v2064 = vmax.f32 %v1674, 0.0
        %v2065 = vmax.f32 %v1785, 0.0
        %v2066 = vmax.f32 %v1787, 0.0
        %v2067 = vmax.f32 %v1898, 0.0
        %v2068 = vmax.f32 %v1900, 0.0
        %v2069 = vmax.f32 %v2011, 0.0
        %v2070 = vmax.f32 %v2013, 0.0
        %v2071 = vmax.f32 %v1678, 0.0
        %v2072 = vmax.f32 %v1680, 0.0
        %v2073 = vmax.f32 %v1791, 0.0
        %v2074 = vmax.f32 %v1793, 0.0
        %v2075 = vmax.f32 %v1904, 0.0
        %v2076 = vmax.f32 %v1906, 0.0
        %v2077 = vmax.f32 %v2017, 0.0
        %v2078 = vmax.f32 %v2019, 0.0
        %v2079 = vmax.f32 %v1684, 0.0
        %v2080 = vmax.f32 %v1686, 0.0
        %v2081 = vmax.f32 %v1797, 0.0
        %v2082 = vmax.f32 %v1799, 0.0
        %v2083 = vmax.f32 %v1910, 0.0
        %v2084 = vmax.f32 %v1912, 0.0
        %v2085 = vmax.f32 %v2023, 0.0
        %v2086 = vmax.f32 %v2025, 0.0
        %v2087 = vmax.f32 %v1690, 0.0
        %v2088 = vmax.f32 %v1692, 0.0
        %v2089 = vmax.f32 %v1803, 0.0
        %v2090 = vmax.f32 %v1805, 0.0
        %v2091 = vmax.f32 %v1916, 0.0
        %v2092 = vmax.f32 %v1918, 0.0
        %v2093 = vmax.f32 %v2029, 0.0
        %v2094 = vmax.f32 %v2031, 0.0
        %v2095 = vmax.f32 %v1696, 0.0
        %v2096 = vmax.f32 %v1698, 0.0
        %v2097 = vmax.f32 %v1809, 0.0
        %v2098 = vmax.f32 %v1811, 0.0
        %v2099 = vmax.f32 %v1922, 0.0
        %v2100 = vmax.f32 %v1924, 0.0
        %v2101 = vmax.f32 %v2035, 0.0
        %v2102 = vmax.f32 %v2037, 0.0
        %v2103 = vld [vmem:[%s8] sm:$0x7]
        %v2104 = vld [vmem:[%s9] sm:$0x7]
        %2106 = vset.pattern.permute.xlu0 0
        %2107 = vperm.xlu0 %2106, %v2104
        %v2108 = vpop.permute.xlu0 %2107
        %v2111 = vsel %vm966, %v2103, 0
        %2113 = vmatprep.subr.mxu0 0.0
        %2114 = vmatpush1.msra.mxu0 0.0
        %2115 = vmatprep.subr.mxu0 0.0
        %2116 = vmatpush1.msra.mxu0 0.0
        %2117 = vmatprep.subr.mxu0 0.0
        %2118 = vmatpush1.msra.mxu0 0.0
        %2119 = vmatprep.subr.mxu0 0.0
        %2120 = vmatpush1.msra.mxu0 0.0
        %2121 = vmatprep.subr.mxu0 0.0
        %2122 = vmatpush1.msra.mxu0 0.0
        %2123 = vmatprep.subr.mxu0 0.0
        %2124 = vmatpush1.msra.mxu0 0.0
        %2125 = vmatprep.subr.mxu0 0.0
        %2126 = vmatpush1.msra.mxu0 0.0
        %2127 = vmatprep.subr.mxu0 0.0
        %2128 = vmatpush1.msra.mxu0 0.0
        %2129 = vmatprep.subr.mxu0 %v2096
        %2130 = vmatpush1.msra.mxu0 %v2095
        %2131 = vmatprep.subr.mxu0 %v2088
        %2132 = vmatpush1.msra.mxu0 %v2087
        %2133 = vmatprep.subr.mxu0 %v2080
        %2134 = vmatpush1.msra.mxu0 %v2079
        %2135 = vmatprep.subr.mxu0 %v2072
        %2136 = vmatpush1.msra.mxu0 %v2071
        %2137 = vmatprep.subr.mxu0 %v2064
        %2138 = vmatpush1.msra.mxu0 %v2063
        %2139 = vmatprep.subr.mxu0 %v2056
        %2140 = vmatpush1.msra.mxu0 %v2055
        %2141 = vmatprep.subr.mxu0 %v2048
        %2142 = vmatpush1.msra.mxu0 %v2047
        %2143 = vmatprep.subr.mxu0 %v2040
        %2144 = vmatpush1.msra.mxu0 %v2039
        %2145 = vmatprep.subr.mxu0 0.0
        %2146 = vmatpush2.msra.mxu0 0.0
        %2147 = vmatprep.subr.mxu0 0.0
        %2148 = vmatpush2.msra.mxu0 0.0
        %2149 = vmatprep.subr.mxu0 0.0
        %2150 = vmatpush2.msra.mxu0 0.0
        %2151 = vmatprep.subr.mxu0 0.0
        %2152 = vmatpush2.msra.mxu0 0.0
        %2153 = vmatprep.subr.mxu0 0.0
        %2154 = vmatpush2.msra.mxu0 0.0
        %2155 = vmatprep.subr.mxu0 0.0
        %2156 = vmatpush2.msra.mxu0 0.0
        %2157 = vmatprep.subr.mxu0 0.0
        %2158 = vmatpush2.msra.mxu0 0.0
        %2159 = vmatprep.subr.mxu0 0.0
        %2160 = vmatpush2.msra.mxu0 0.0
        %2161 = vmatprep.subr.mxu0 0.0
        %2162 = vmatpush2.msra.mxu0 0.0
        %2163 = vmatprep.subr.mxu0 0.0
        %2164 = vmatpush2.msra.mxu0 0.0
        %2165 = vmatprep.subr.mxu0 0.0
        %2166 = vmatpush2.msra.mxu0 0.0
        %2167 = vmatprep.subr.mxu0 0.0
        %2168 = vmatpush2.msra.mxu0 0.0
        %2169 = vmatprep.subr.mxu0 0.0
        %2170 = vmatpush2.msra.mxu0 0.0
        %2171 = vmatprep.subr.mxu0 0.0
        %2172 = vmatpush2.msra.mxu0 0.0
        %2173 = vmatprep.subr.mxu0 0.0
        %2174 = vmatpush2.msra.mxu0 0.0
        %2175 = vmatprep.subr.mxu0 0.0
        %2176 = vmatpush2.msra.mxu0 0.0
        %2177 = vmatprep.mubr.f32.mxu0 0.0
        %2178 = vmatmul.mubr.f32.gmra.mxu0 %v2111
        %v2179 = vpop.f32.mrf.mxu0
        %v2180 = vadd.f32 %v2108, %v2179
        %v2181 = vpop.f32.mrf.mxu0
        %v2182 = vadd.f32 %v2108, %v2181
        %2183 = vdwg.mxu0
        %2184 = vmatprep.subr.mxu0 0.0
        %2185 = vmatpush1.msra.mxu0 0.0
        %2186 = vmatprep.subr.mxu0 0.0
        %2187 = vmatpush1.msra.mxu0 0.0
        %2188 = vmatprep.subr.mxu0 0.0
        %2189 = vmatpush1.msra.mxu0 0.0
        %2190 = vmatprep.subr.mxu0 0.0
        %2191 = vmatpush1.msra.mxu0 0.0
        %2192 = vmatprep.subr.mxu0 0.0
        %2193 = vmatpush1.msra.mxu0 0.0
        %2194 = vmatprep.subr.mxu0 0.0
        %2195 = vmatpush1.msra.mxu0 0.0
        %2196 = vmatprep.subr.mxu0 0.0
        %2197 = vmatpush1.msra.mxu0 0.0
        %2198 = vmatprep.subr.mxu0 0.0
        %2199 = vmatpush1.msra.mxu0 0.0
        %2200 = vmatprep.subr.mxu0 %v2098
        %2201 = vmatpush1.msra.mxu0 %v2097
        %2202 = vmatprep.subr.mxu0 %v2090
        %2203 = vmatpush1.msra.mxu0 %v2089
        %2204 = vmatprep.subr.mxu0 %v2082
        %2205 = vmatpush1.msra.mxu0 %v2081
        %2206 = vmatprep.subr.mxu0 %v2074
        %2207 = vmatpush1.msra.mxu0 %v2073
        %2208 = vmatprep.subr.mxu0 %v2066
        %2209 = vmatpush1.msra.mxu0 %v2065
        %2210 = vmatprep.subr.mxu0 %v2058
        %2211 = vmatpush1.msra.mxu0 %v2057
        %2212 = vmatprep.subr.mxu0 %v2050
        %2213 = vmatpush1.msra.mxu0 %v2049
        %2214 = vmatprep.subr.mxu0 %v2042
        %2215 = vmatpush1.msra.mxu0 %v2041
        %2216 = vmatprep.subr.mxu0 0.0
        %2217 = vmatpush2.msra.mxu0 0.0
        %2218 = vmatprep.subr.mxu0 0.0
        %2219 = vmatpush2.msra.mxu0 0.0
        %2220 = vmatprep.subr.mxu0 0.0
        %2221 = vmatpush2.msra.mxu0 0.0
        %2222 = vmatprep.subr.mxu0 0.0
        %2223 = vmatpush2.msra.mxu0 0.0
        %2224 = vmatprep.subr.mxu0 0.0
        %2225 = vmatpush2.msra.mxu0 0.0
        %2226 = vmatprep.subr.mxu0 0.0
        %2227 = vmatpush2.msra.mxu0 0.0
        %2228 = vmatprep.subr.mxu0 0.0
        %2229 = vmatpush2.msra.mxu0 0.0
        %2230 = vmatprep.subr.mxu0 0.0
        %2231 = vmatpush2.msra.mxu0 0.0
        %2232 = vmatprep.subr.mxu0 0.0
        %2233 = vmatpush2.msra.mxu0 0.0
        %2234 = vmatprep.subr.mxu0 0.0
        %2235 = vmatpush2.msra.mxu0 0.0
        %2236 = vmatprep.subr.mxu0 0.0
        %2237 = vmatpush2.msra.mxu0 0.0
        %2238 = vmatprep.subr.mxu0 0.0
        %2239 = vmatpush2.msra.mxu0 0.0
        %2240 = vmatprep.subr.mxu0 0.0
        %2241 = vmatpush2.msra.mxu0 0.0
        %2242 = vmatprep.subr.mxu0 0.0
        %2243 = vmatpush2.msra.mxu0 0.0
        %2244 = vmatprep.subr.mxu0 0.0
        %2245 = vmatpush2.msra.mxu0 0.0
        %2246 = vmatprep.subr.mxu0 0.0
        %2247 = vmatpush2.msra.mxu0 0.0
        %2248 = vmatprep.mubr.f32.mxu0 0.0
        %2249 = vmatmul.mubr.f32.gmra.mxu0 %v2111
        %v2250 = vpop.f32.mrf.mxu0
        %v2251 = vadd.f32 %v2108, %v2250
        %v2252 = vpop.f32.mrf.mxu0
        %v2253 = vadd.f32 %v2108, %v2252
        %2254 = vdwg.mxu0
        %2255 = vmatprep.subr.mxu0 0.0
        %2256 = vmatpush1.msra.mxu0 0.0
        %2257 = vmatprep.subr.mxu0 0.0
        %2258 = vmatpush1.msra.mxu0 0.0
        %2259 = vmatprep.subr.mxu0 0.0
        %2260 = vmatpush1.msra.mxu0 0.0
        %2261 = vmatprep.subr.mxu0 0.0
        %2262 = vmatpush1.msra.mxu0 0.0
        %2263 = vmatprep.subr.mxu0 0.0
        %2264 = vmatpush1.msra.mxu0 0.0
        %2265 = vmatprep.subr.mxu0 0.0
        %2266 = vmatpush1.msra.mxu0 0.0
        %2267 = vmatprep.subr.mxu0 0.0
        %2268 = vmatpush1.msra.mxu0 0.0
        %2269 = vmatprep.subr.mxu0 0.0
        %2270 = vmatpush1.msra.mxu0 0.0
        %2271 = vmatprep.subr.mxu0 %v2100
        %2272 = vmatpush1.msra.mxu0 %v2099
        %2273 = vmatprep.subr.mxu0 %v2092
        %2274 = vmatpush1.msra.mxu0 %v2091
        %2275 = vmatprep.subr.mxu0 %v2084
        %2276 = vmatpush1.msra.mxu0 %v2083
        %2277 = vmatprep.subr.mxu0 %v2076
        %2278 = vmatpush1.msra.mxu0 %v2075
        %2279 = vmatprep.subr.mxu0 %v2068
        %2280 = vmatpush1.msra.mxu0 %v2067
        %2281 = vmatprep.subr.mxu0 %v2060
        %2282 = vmatpush1.msra.mxu0 %v2059
        %2283 = vmatprep.subr.mxu0 %v2052
        %2284 = vmatpush1.msra.mxu0 %v2051
        %2285 = vmatprep.subr.mxu0 %v2044
        %2286 = vmatpush1.msra.mxu0 %v2043
        %2287 = vmatprep.subr.mxu0 0.0
        %2288 = vmatpush2.msra.mxu0 0.0
        %2289 = vmatprep.subr.mxu0 0.0
        %2290 = vmatpush2.msra.mxu0 0.0
        %2291 = vmatprep.subr.mxu0 0.0
        %2292 = vmatpush2.msra.mxu0 0.0
        %2293 = vmatprep.subr.mxu0 0.0
        %2294 = vmatpush2.msra.mxu0 0.0
        %2295 = vmatprep.subr.mxu0 0.0
        %2296 = vmatpush2.msra.mxu0 0.0
        %2297 = vmatprep.subr.mxu0 0.0
        %2298 = vmatpush2.msra.mxu0 0.0
        %2299 = vmatprep.subr.mxu0 0.0
        %2300 = vmatpush2.msra.mxu0 0.0
        %2301 = vmatprep.subr.mxu0 0.0
        %2302 = vmatpush2.msra.mxu0 0.0
        %2303 = vmatprep.subr.mxu0 0.0
        %2304 = vmatpush2.msra.mxu0 0.0
        %2305 = vmatprep.subr.mxu0 0.0
        %2306 = vmatpush2.msra.mxu0 0.0
        %2307 = vmatprep.subr.mxu0 0.0
        %2308 = vmatpush2.msra.mxu0 0.0
        %2309 = vmatprep.subr.mxu0 0.0
        %2310 = vmatpush2.msra.mxu0 0.0
        %2311 = vmatprep.subr.mxu0 0.0
        %2312 = vmatpush2.msra.mxu0 0.0
        %2313 = vmatprep.subr.mxu0 0.0
        %2314 = vmatpush2.msra.mxu0 0.0
        %2315 = vmatprep.subr.mxu0 0.0
        %2316 = vmatpush2.msra.mxu0 0.0
        %2317 = vmatprep.subr.mxu0 0.0
        %2318 = vmatpush2.msra.mxu0 0.0
        %2319 = vmatprep.mubr.f32.mxu0 0.0
        %2320 = vmatmul.mubr.f32.gmra.mxu0 %v2111
        %v2321 = vpop.f32.mrf.mxu0
        %v2322 = vadd.f32 %v2108, %v2321
        %v2323 = vpop.f32.mrf.mxu0
        %v2324 = vadd.f32 %v2108, %v2323
        %2325 = vdwg.mxu0
        %2326 = vmatprep.subr.mxu0 0.0
        %2327 = vmatpush1.msra.mxu0 0.0
        %2328 = vmatprep.subr.mxu0 0.0
        %2329 = vmatpush1.msra.mxu0 0.0
        %2330 = vmatprep.subr.mxu0 0.0
        %2331 = vmatpush1.msra.mxu0 0.0
        %2332 = vmatprep.subr.mxu0 0.0
        %2333 = vmatpush1.msra.mxu0 0.0
        %2334 = vmatprep.subr.mxu0 0.0
        %2335 = vmatpush1.msra.mxu0 0.0
        %2336 = vmatprep.subr.mxu0 0.0
        %2337 = vmatpush1.msra.mxu0 0.0
        %2338 = vmatprep.subr.mxu0 0.0
        %2339 = vmatpush1.msra.mxu0 0.0
        %2340 = vmatprep.subr.mxu0 0.0
        %2341 = vmatpush1.msra.mxu0 0.0
        %2342 = vmatprep.subr.mxu0 %v2102
        %2343 = vmatpush1.msra.mxu0 %v2101
        %2344 = vmatprep.subr.mxu0 %v2094
        %2345 = vmatpush1.msra.mxu0 %v2093
        %2346 = vmatprep.subr.mxu0 %v2086
        %2347 = vmatpush1.msra.mxu0 %v2085
        %2348 = vmatprep.subr.mxu0 %v2078
        %2349 = vmatpush1.msra.mxu0 %v2077
        %2350 = vmatprep.subr.mxu0 %v2070
        %2351 = vmatpush1.msra.mxu0 %v2069
        %2352 = vmatprep.subr.mxu0 %v2062
        %2353 = vmatpush1.msra.mxu0 %v2061
        %2354 = vmatprep.subr.mxu0 %v2054
        %2355 = vmatpush1.msra.mxu0 %v2053
        %2356 = vmatprep.subr.mxu0 %v2046
        %2357 = vmatpush1.msra.mxu0 %v2045
        %2358 = vmatprep.subr.mxu0 0.0
        %2359 = vmatpush2.msra.mxu0 0.0
        %2360 = vmatprep.subr.mxu0 0.0
        %2361 = vmatpush2.msra.mxu0 0.0
        %2362 = vmatprep.subr.mxu0 0.0
        %2363 = vmatpush2.msra.mxu0 0.0
        %2364 = vmatprep.subr.mxu0 0.0
        %2365 = vmatpush2.msra.mxu0 0.0
        %2366 = vmatprep.subr.mxu0 0.0
        %2367 = vmatpush2.msra.mxu0 0.0
        %2368 = vmatprep.subr.mxu0 0.0
        %2369 = vmatpush2.msra.mxu0 0.0
        %2370 = vmatprep.subr.mxu0 0.0
        %2371 = vmatpush2.msra.mxu0 0.0
        %2372 = vmatprep.subr.mxu0 0.0
        %2373 = vmatpush2.msra.mxu0 0.0
        %2374 = vmatprep.subr.mxu0 0.0
        %2375 = vmatpush2.msra.mxu0 0.0
        %2376 = vmatprep.subr.mxu0 0.0
        %2377 = vmatpush2.msra.mxu0 0.0
        %2378 = vmatprep.subr.mxu0 0.0
        %2379 = vmatpush2.msra.mxu0 0.0
        %2380 = vmatprep.subr.mxu0 0.0
        %2381 = vmatpush2.msra.mxu0 0.0
        %2382 = vmatprep.subr.mxu0 0.0
        %2383 = vmatpush2.msra.mxu0 0.0
        %2384 = vmatprep.subr.mxu0 0.0
        %2385 = vmatpush2.msra.mxu0 0.0
        %2386 = vmatprep.subr.mxu0 0.0
        %2387 = vmatpush2.msra.mxu0 0.0
        %2388 = vmatprep.subr.mxu0 0.0
        %2389 = vmatpush2.msra.mxu0 0.0
        %2390 = vmatprep.mubr.f32.mxu0 0.0
        %2391 = vmatmul.mubr.f32.gmra.mxu0 %v2111
        %v2392 = vpop.f32.mrf.mxu0
        %v2393 = vadd.f32 %v2108, %v2392
        %v2394 = vpop.f32.mrf.mxu0
        %v2395 = vadd.f32 %v2108, %v2394
        %2396 = vdwg.mxu0
        %v2397 = vxor.u32 %v2180, 2147483648
        %v2398 = vxor.u32 %v2182, 2147483648
        %v2399 = vxor.u32 %v2251, 2147483648
        %v2400 = vxor.u32 %v2253, 2147483648
        %v2401 = vxor.u32 %v2322, 2147483648
        %v2402 = vxor.u32 %v2324, 2147483648
        %v2403 = vxor.u32 %v2393, 2147483648
        %v2404 = vxor.u32 %v2395, 2147483648
        %v2405 = vmul.f32 %v2397, 1.442695
        %v2406 = vpow.pop %v2405
        %v2407 = vmul.f32 %v2398, 1.442695
        %v2408 = vpow.pop %v2407
        %v2409 = vmul.f32 %v2399, 1.442695
        %v2410 = vpow.pop %v2409
        %v2411 = vmul.f32 %v2400, 1.442695
        %v2412 = vpow.pop %v2411
        %v2413 = vmul.f32 %v2401, 1.442695
        %v2414 = vpow.pop %v2413
        %v2415 = vmul.f32 %v2402, 1.442695
        %v2416 = vpow.pop %v2415
        %v2417 = vmul.f32 %v2403, 1.442695
        %v2418 = vpow.pop %v2417
        %v2419 = vmul.f32 %v2404, 1.442695
        %v2420 = vpow.pop %v2419
        %v2421 = vadd.f32 %v2406, 1.0
        %v2422 = vadd.f32 %v2408, 1.0
        %v2423 = vadd.f32 %v2410, 1.0
        %v2424 = vadd.f32 %v2412, 1.0
        %v2425 = vadd.f32 %v2414, 1.0
        %v2426 = vadd.f32 %v2416, 1.0
        %v2427 = vadd.f32 %v2418, 1.0
        %v2428 = vadd.f32 %v2420, 1.0
        %v2429 = vrcp.pop %v2421
        %v2430 = vmul.f32 1.0, %v2429
        %v2431 = vrcp.pop %v2422
        %v2432 = vmul.f32 1.0, %v2431
        %v2433 = vrcp.pop %v2423
        %v2434 = vmul.f32 1.0, %v2433
        %v2435 = vrcp.pop %v2424
        %v2436 = vmul.f32 1.0, %v2435
        %v2437 = vrcp.pop %v2425
        %v2438 = vmul.f32 1.0, %v2437
        %v2439 = vrcp.pop %v2426
        %v2440 = vmul.f32 1.0, %v2439
        %v2441 = vrcp.pop %v2427
        %v2442 = vmul.f32 1.0, %v2441
        %v2443 = vrcp.pop %v2428
        %v2444 = vmul.f32 1.0, %v2443
        %v2453 = vcombine.low %v2430, %v2432
        %v2454 = vcombine.low %v2434, %v2436
        %v2455 = vcombine.low %v2438, %v2440
        %v2456 = vcombine.low %v2442, %v2444
        %2461 = vst [vmem:[%s353] sm:$0x77] %v2453
        %2462 = vst [vmem:[%s353 + $0x8] sm:$0x77] %v2454
        %2463 = vst [vmem:[%s353 + $0x10] sm:$0x77] %v2455
        %2464 = vst [vmem:[%s353 + $0x18] sm:$0x77] %v2456
        %s2465 = sand.u32 %s247, 1
        %s2466 = scalar_lea.sflag [#allocation3], %s2465
        %s2467 = sand.u32 %s247, 1
        %s2468 = smul.addr %s2467, 32
        %s2469 = scalar_lea.vmem [#allocation2], %s2468
        // Predicated region
        $region61: #{tpu_custom_call.1} parent=59 // pred_check
          %p2470 = pneg %p257
        $region62: #{tpu_custom_call.1} parent=59 // pred_check_branch
          %2472 = sbr.rel (%p2470) target = $region64
        $region63: #{tpu_custom_call.1} parent=59 // pred_region
          %s2473 = smul.u32 8, %s24
          %s2475 = ssub.s32 512, 512
          %2476 = vsyncadd %s2466, %s2475
          %s2477 = smul.addr %s2473, 64
          %s2478 = scalar_lea.hbm %s10, %s2477
          %s2480 = sshll.u32 %s2469, 4
          %s2481 = int_to_ptr.vmem [resolvable:$true] %s2480
          %2483 = dma.vmem_to_hbm [thread:$0]  %s2481, 512, %s2478, %s2466
        $region64: #{tpu_custom_call.1} parent=59 // pred_fallthru
          _
      $region60: #{tpu_custom_call.1} parent=5 // pred_fallthru
        _
      %p2484 = scmp.le.s32.totalorder 2, %s19
      // Predicated region
      $region65: #{tpu_custom_call.1} parent=5 // pred_check
        %p2485 = pneg %p2484
      $region66: #{tpu_custom_call.1} parent=5 // pred_check_branch
        %2487 = sbr.rel (%p2485) target = $region68
      $region67: #{tpu_custom_call.1} parent=5 // pred_region
        %s2488 = ssub.s32 %s19, 2
        // Predicated region
        $region69: #{tpu_custom_call.1} parent=67 // pred_check
          %p2489 = pneg %p263
        $region70: #{tpu_custom_call.1} parent=67 // pred_check_branch
          %2491 = sbr.rel (%p2489) target = $region72
        $region71: #{tpu_custom_call.1} parent=67 // pred_region
          %s2492 = sand.u32 %s248, 1
          %s2493 = scalar_lea.sflag [#allocation3], %s2492
          %s2494 = sand.u32 %s248, 1
          %s2495 = smul.addr %s2494, 32
          %s2496 = scalar_lea.vmem [#allocation2], %s2495
          %2497 = dma.done %s2493, 512
        $region72: #{tpu_custom_call.1} parent=67 // pred_fallthru
          _
      $region68: #{tpu_custom_call.1} parent=5 // pred_fallthru
        _
    $region6: #{tpu_custom_call.1} parent=1 // loop_footer
      %s23 = sadd.s32 1, %s19
    $region7: #{tpu_custom_call.1} parent=1 // loop_footer_branch
      %18 = sbr.rel target = $region3
    $region8: #{tpu_custom_call.1} parent=1 // loop_exit
      _
    %2498 = vsyncpa [#allocation3], 1
    %s2499 = scalar_lea.sflag [#allocation3], 1
    %2500 = vsyncpa %s2499, 1

</llo_original>
